<compile_context>
chip_gen: v5e
topology: v5e:2x2
jax: 0.10.0
libtpu: 0.0.40
codegen_flags: <defaults>
</compile_context>

<pallas_src>
import functools

import jax
import jax.numpy as jnp
from jax.experimental import pallas as pl
from jax.experimental.pallas import tpu as pltpu

LANE = 128      # lane granule (last / contraction dims)
SUBLANE = 16    # sublane granule for bf16 row dims


def _round_up(x, m):
    return (x + m - 1) // m * m


def _choose_tile(padded_dim, target, granule):
    """Largest tile <= target that is a multiple of granule and divides padded_dim."""
    t = min(target, padded_dim)
    t = max(granule, (t // granule) * granule)
    while padded_dim % t != 0:
        t -= granule
    return t


# ----------------------------------------------------------------------------
# Pallas kernel: tiled matmul + fused epilogue
# ----------------------------------------------------------------------------
def _fused_matmul_kernel(*refs, has_scale, has_add, apply_relu, use_acc):
    it = iter(refs)
    x_ref = next(it)
    w_ref = next(it)
    scale_ref = next(it) if has_scale else None
    shift_ref = next(it) if has_scale else None
    add_ref = next(it) if has_add else None
    alpha_ref = next(it) if has_add else None
    o_ref = next(it)
    acc_ref = next(it) if use_acc else None

    def epilogue(y):
        if has_scale:                  # bias + folded BatchNorm
            y = y * scale_ref[...] + shift_ref[...]
        if apply_relu:
            y = jnp.maximum(y, 0.0)
        if has_add:                    # fused (1+eps)*h / +vn / residual adds
            y = y + alpha_ref[0] * add_ref[...].astype(jnp.float32)
        return y.astype(o_ref.dtype)

    if not use_acc:
        # Single K step: no accumulator scratch, write the tile directly.
        o_ref[...] = epilogue(
            jnp.dot(x_ref[...], w_ref[...], preferred_element_type=jnp.float32))
    else:
        k = pl.program_id(2)

        @pl.when(k == 0)
        def _():
            acc_ref[...] = jnp.zeros_like(acc_ref)

        acc_ref[...] += jnp.dot(x_ref[...], w_ref[...],
                                preferred_element_type=jnp.float32)

        @pl.when(k == pl.num_programs(2) - 1)
        def _():
            o_ref[...] = epilogue(acc_ref[...])


def fused_matmul(x, w, scale=None, shift=None, add=None, alpha=None,
                 apply_relu=False, out_dtype=jnp.bfloat16,
                 tile_m=512, tile_n=512, tile_k=512):
    """out = (x @ w) [* scale + shift] [relu] [+ alpha * add].

    All operands must already be tile-aligned (no pad/slice round trips here):
      x:  [M, K] bf16, M % 16 == 0, K % 128 == 0
      w:  [K, N] bf16, N % 128 == 0
      scale/shift: [1, N] f32,  add: [M, N] bf16,  alpha: scalar f32
    Returns the full [M, N] result in out_dtype (padded regions stay padded).
    """
    m, k = x.shape
    k2, n = w.shape
    assert k == k2, (x.shape, w.shape)
    assert m % SUBLANE == 0 and k % LANE == 0 and n % LANE == 0, (x.shape, w.shape)
    has_scale = scale is not None
    has_add = add is not None

    tm = _choose_tile(m, tile_m, SUBLANE)
    tk = _choose_tile(k, tile_k, LANE)
    tn = _choose_tile(n, tile_n, LANE)
    n_k = k // tk
    use_acc = n_k > 1

    inputs = [x, w]
    in_specs = [
        pl.BlockSpec((tm, tk), lambda i, j, kk: (i, kk)),
        pl.BlockSpec((tk, tn), lambda i, j, kk: (kk, j)),
    ]
    if has_scale:
        inputs += [scale, shift]
        in_specs += [pl.BlockSpec((1, tn), lambda i, j, kk: (0, j))] * 2
    if has_add:
        if alpha is None:
            alpha = 1.0
        inputs += [add, jnp.reshape(jnp.asarray(alpha, jnp.float32), (1,))]
        in_specs += [
            pl.BlockSpec((tm, tn), lambda i, j, kk: (i, j)),
            pl.BlockSpec(memory_space=pltpu.MemorySpace.SMEM),
        ]

    kernel = functools.partial(
        _fused_matmul_kernel, has_scale=has_scale, has_add=has_add,
        apply_relu=apply_relu, use_acc=use_acc)

    # VMEM budget: double-buffered operand/output tiles + f32 accumulator, with
    # 2x headroom; floor at the 32 MiB default, cap below v7x's 64 MiB/TC.
    out_bytes = jnp.dtype(out_dtype).itemsize
    need = 2 * (tm * tk * 2 + tk * tn * 2
                + tm * tn * 2 * int(has_add)
                + 2 * tn * 4 * int(has_scale)
                + tm * tn * out_bytes)
    need += tm * tn * 4 * int(use_acc)
    vmem_limit = int(min(56 << 20, max(32 << 20, 2 * need)))

    # TODO(synk): if profiling shows exposed DMA on a long-K adj matmul, add
    # pipeline_mode=pl.Buffered(3) to the x/w BlockSpecs for that call only.
    return pl.pallas_call(
        kernel,
        out_shape=jax.ShapeDtypeStruct((m, n), out_dtype),
        grid_spec=pltpu.PrefetchScalarGridSpec(
            num_scalar_prefetch=0,
            grid=(m // tm, n // tn, n_k),          # reduction axis last
            in_specs=in_specs,
            out_specs=pl.BlockSpec((tm, tn), lambda i, j, kk: (i, j)),
            scratch_shapes=([pltpu.VMEM((tm, tn), jnp.float32)] if use_acc else []),
        ),
        compiler_params=pltpu.CompilerParams(
            dimension_semantics=("parallel", "parallel", "arbitrary"),
            vmem_limit_bytes=vmem_limit,
        ),
    )(*inputs)


# ----------------------------------------------------------------------------
# Parameter construction (deterministic, fresh-module init, eval mode)
# ----------------------------------------------------------------------------
def _bn_fold(dim, eps=1e-5):
    # Fresh BatchNorm1d in eval mode: gamma=1, beta=0, running_mean=0, running_var=1.
    gamma = jnp.ones((dim,), jnp.float32)
    beta = jnp.zeros((dim,), jnp.float32)
    mean = jnp.zeros((dim,), jnp.float32)
    var = jnp.ones((dim,), jnp.float32)
    scale = gamma / jnp.sqrt(var + eps)
    shift = beta - mean * scale
    return scale, shift


def init_params(key, num_tasks, num_layer, emb_dim, atom_vocab_sizes):
    keys = iter(jax.random.split(key, 256))

    def nrm(shape, s=0.1):
        return (s * jax.random.normal(next(keys), shape)).astype(jnp.float32)

    params = {}
    # AtomEncoder: one embedding table per categorical atom feature (summed).
    params["atom_emb"] = [nrm((v, emb_dim)) for v in atom_vocab_sizes]
    # Virtual node embedding (OGB initializes it to zeros).
    params["vn_emb"] = jnp.zeros((emb_dim,), jnp.float32)

    params["convs"] = []
    params["bn_layer"] = []
    for _ in range(num_layer):
        bn1_s, bn1_b = _bn_fold(2 * emb_dim)
        params["convs"].append({
            "eps": jnp.zeros((), jnp.float32),
            "w1": nrm((emb_dim, 2 * emb_dim)),
            "b1": nrm((2 * emb_dim,)),
            "bn1_scale": bn1_s, "bn1_shift": bn1_b,
            "w2": nrm((2 * emb_dim, emb_dim)),
            "b2": nrm((emb_dim,)),
        })
        bnl_s, bnl_b = _bn_fold(emb_dim)
        params["bn_layer"].append({"scale": bnl_s, "shift": bnl_b})

    params["vn_mlps"] = []
    for _ in range(num_layer - 1):
        bn1_s, bn1_b = _bn_fold(2 * emb_dim)
        bn2_s, bn2_b = _bn_fold(emb_dim)
        params["vn_mlps"].append({
            "w1": nrm((emb_dim, 2 * emb_dim)), "b1": nrm((2 * emb_dim,)),
            "bn1_scale": bn1_s, "bn1_shift": bn1_b,
            "w2": nrm((2 * emb_dim, emb_dim)), "b2": nrm((emb_dim,)),
            "bn2_scale": bn2_s, "bn2_shift": bn2_b,
        })

    params["pred_w"] = nrm((emb_dim, num_tasks))
    params["pred_b"] = nrm((num_tasks,))
    return params


def prepare_params(params, num_layer, emb_dim):
    """Pad + cast the static weights once: bf16 MXU weights, folded BN scale/shift."""
    dp = _round_up(emb_dim, LANE)
    dp2 = _round_up(2 * emb_dim, LANE)

    def padw(w, r, c, dtype):
        return jnp.pad(w, ((0, r - w.shape[0]), (0, c - w.shape[1]))).astype(dtype)

    def padv(v, c):
        return jnp.pad(jnp.reshape(v, (1, -1)).astype(jnp.float32),
                       ((0, 0), (0, c - v.shape[-1])))

    prep = {
        "atom_emb": params["atom_emb"],
        "vn_emb": jnp.pad(params["vn_emb"], (0, dp - emb_dim)).astype(jnp.bfloat16),
        "pred_w": params["pred_w"],
        "pred_b": params["pred_b"],
        "convs": [],
        "vn_mlps": [],
    }
    for l in range(num_layer):
        c = params["convs"][l]
        bnl = params["bn_layer"][l]
        prep["convs"].append({
            "eps": c["eps"],
            "w1": padw(c["w1"], dp, dp2, jnp.bfloat16),
            "s1": padv(c["bn1_scale"], dp2),
            "t1": padv(c["bn1_shift"] + c["b1"] * c["bn1_scale"], dp2),
            "w2": padw(c["w2"], dp2, dp, jnp.bfloat16),
            "s2": padv(bnl["scale"], dp),
            "t2": padv(bnl["shift"] + c["b2"] * bnl["scale"], dp),
        })
    for l in range(num_layer - 1):
        v = params["vn_mlps"][l]
        prep["vn_mlps"].append({
            "w1": padw(v["w1"], dp, dp2, jnp.float32),
            "s1": padv(v["bn1_scale"], dp2),
            "t1": padv(v["bn1_shift"] + v["b1"] * v["bn1_scale"], dp2),
            "w2": padw(v["w2"], dp2, dp, jnp.float32),
            "s2": padv(v["bn2_scale"], dp),
            "t2": padv(v["bn2_shift"] + v["b2"] * v["bn2_scale"], dp),
        })
    return prep


# ----------------------------------------------------------------------------
# Forward pass (GINVirtualnode.forward, eval mode)
# ----------------------------------------------------------------------------
def gin_virtualnode_forward(prep, x_cat, edge_index, batch, *,
                            num_graphs, num_layer, emb_dim, residual=False):
    n_nodes = x_cat.shape[0]
    dp = prep["convs"][0]["w1"].shape[0]          # padded emb_dim

    # Node dim is also a contraction dim (adj/pooling) -> pad once to LANE.
    npad = _round_up(n_nodes, LANE)
    gpad = _round_up(num_graphs, SUBLANE)

    # AtomEncoder (embedding gathers, XLA glue), padded once to bf16 tile form.
    h0 = prep["atom_emb"][0][x_cat[:, 0]]
    for i in range(1, x_cat.shape[1]):
        h0 = h0 + prep["atom_emb"][i][x_cat[:, i]]
    h = jnp.pad(h0, ((0, npad - n_nodes), (0, dp - emb_dim))).astype(jnp.bfloat16)

    batch_gather = jnp.pad(batch, (0, npad - n_nodes))                 # vn gather
    batch_pool = jnp.pad(batch, (0, npad - n_nodes), constant_values=-1)  # pooling

    # Dense adjacency A[dst, src] += 1 (PyG source->target flow), built directly
    # in bf16 at the tile-aligned shape (entries are small exact integers).
    # TODO(synk): replace this dense [N,N] path with a CSR scalar-prefetch
    # gather/segment-sum kernel (O(E*d) instead of O(N^2*d)) for large graphs.
    adj = jnp.zeros((npad, npad), jnp.bfloat16).at[
        edge_index[1], edge_index[0]].add(1.0)

    # Dense pooling matrices [G, N] in bf16 (padded node columns are zero).
    onehot = (batch_pool[None, :] == jnp.arange(gpad)[:, None])
    counts = jnp.sum(onehot, axis=1).astype(jnp.float32)
    pool_sum = onehot.astype(jnp.bfloat16)
    pool_mean = (onehot / jnp.maximum(counts, 1.0)[:, None]).astype(jnp.bfloat16)

    vn = jnp.broadcast_to(prep["vn_emb"][None, :], (gpad, dp)).astype(jnp.bfloat16)

    h_list = [h]
    for layer in range(num_layer):
        conv = prep["convs"][layer]

        # '+ vn[batch]' and the GIN message ReLU: one fused XLA elementwise pass
        # over the padded bf16 activation (XLA fuses the gather/add/max).
        h_in = h_list[layer] + vn[batch_gather]
        relu_h = jnp.maximum(h_in, 0)

        # TODO(synk): GINNodeVirtualnode source not provided; reconstructed from
        # the OGB reference with edge_feat=False (message = relu(x_j)).
        # Fused: pre = adj @ relu(h_in) + (1 + eps) * h_in
        pre = fused_matmul(adj, relu_h, add=h_in, alpha=1.0 + conv["eps"])

        # GIN MLP: Linear(d,2d) + BN + ReLU (bias + BN folded into scale/shift).
        hidden = fused_matmul(pre, conv["w1"], scale=conv["s1"], shift=conv["t1"],
                              apply_relu=True)

        is_last = layer == num_layer - 1
        # Linear(2d,d) + per-layer BN (+ReLU if not last) (+fused residual add).
        h_next = fused_matmul(hidden, conv["w2"], scale=conv["s2"], shift=conv["t2"],
                              apply_relu=not is_last,
                              add=h_in if residual else None)
        h_list.append(h_next)          # dropout(p=0.5) is identity in eval mode

        # Virtual-node update (all layers except the last).
        if layer < num_layer - 1:
            vm = prep["vn_mlps"][layer]
            # vn_tmp = global_add_pool(h_in, batch) + vn  (pooling matmul + fused add)
            vn_tmp = fused_matmul(pool_sum, h_in, add=vn)
            # Tiny [G, emb_dim] MLP: plain XLA (Pallas launch overhead dominates).
            vt = vn_tmp.astype(jnp.float32)
            v_hid = jnp.maximum((vt @ vm["w1"]) * vm["s1"] + vm["t1"], 0.0)
            vn_out = jnp.maximum((v_hid @ vm["w2"]) * vm["s2"] + vm["t2"], 0.0)
            vn_new = vn.astype(jnp.float32) + vn_out if residual else vn_out
            vn = vn_new.astype(jnp.bfloat16)

    node_rep = h_list[-1]                                       # JK == 'last'
    # global_mean_pool; tiny final consumer -> write f32 directly.
    h_graph = fused_matmul(pool_mean, node_rep, out_dtype=jnp.float32)
    # graph_pred_linear: tiny [G, num_tasks] — plain XLA.
    out = h_graph[:num_graphs, :emb_dim] @ prep["pred_w"] + prep["pred_b"]
    return out


# ----------------------------------------------------------------------------
# Demo
# ----------------------------------------------------------------------------
if __name__ == "__main__":
    key = jax.random.PRNGKey(0)
    k_feat, k_param = jax.random.split(key, 2)

    num_tasks = 3
    num_layer = 3          # module requires >= 2
    emb_dim = 32
    atom_vocab_sizes = (10, 5)

    # Two graphs: nodes 0..4 (graph 0, a 5-ring) and 5..7 (graph 1, a 3-ring).
    graph_nodes = [list(range(0, 5)), list(range(5, 8))]
    edges = []
    for nodes in graph_nodes:
        for a, b in zip(nodes, nodes[1:] + nodes[:1]):
            edges.append((a, b))
            edges.append((b, a))
    edge_index = jnp.array(edges, dtype=jnp.int32).T          # [2, 16]
    batch = jnp.array([0] * 5 + [1] * 3, dtype=jnp.int32)     # [8]
    num_graphs = 2
    n_nodes = batch.shape[0]

    feat_keys = jax.random.split(k_feat, len(atom_vocab_sizes))
    x_cat = jnp.stack(
        [jax.random.randint(fk, (n_nodes,), 0, v)
         for fk, v in zip(feat_keys, atom_vocab_sizes)], axis=1).astype(jnp.int32)

    params = init_params(k_param, num_tasks, num_layer, emb_dim, atom_vocab_sizes)
    prep = prepare_params(params, num_layer, emb_dim)

    fwd = jax.jit(functools.partial(
        gin_virtualnode_forward,
        num_graphs=num_graphs, num_layer=num_layer,
        emb_dim=emb_dim, residual=False))

    out = fwd(prep, x_cat, edge_index, batch)
    out = jax.block_until_ready(out)
    assert out.shape == (num_graphs, num_tasks), out.shape
    assert out.dtype == jnp.float32
    assert bool(jnp.all(jnp.isfinite(out)))
    print("KERNEL_OK")
</pallas_src>

<mosaic_0001>
module attributes {stable_mosaic.version = 11 : i64} {
  func.func @_fused_matmul_kernel(%arg0: i32, %arg1: i32, %arg2: i32, %arg3: memref<128x128xbf16, #tpu.memory_space<vmem>>, %arg4: memref<128x128xbf16, #tpu.memory_space<vmem>>, %arg5: memref<1x128xf32, #tpu.memory_space<vmem>>, %arg6: memref<1x128xf32, #tpu.memory_space<vmem>>, %arg7: memref<128x128xbf16, #tpu.memory_space<vmem>>) attributes {dimension_semantics = [#tpu.dimension_semantics<parallel>, #tpu.dimension_semantics<parallel>, #tpu.dimension_semantics<arbitrary>], iteration_bounds = array<i64: 1, 1, 1>, scalar_prefetch = 0 : i64, scratch_operands = 0 : i64, tpu.core_type = #tpu.core_type<tc>, window_params = [{transform_indices = @transform_0, window_bounds = array<i64: 128, 128>}, {transform_indices = @transform_1, window_bounds = array<i64: 128, 128>}, {transform_indices = @transform_2, window_bounds = array<i64: 1, 128>}, {transform_indices = @transform_3, window_bounds = array<i64: 1, 128>}, {transform_indices = @transform_4, window_bounds = array<i64: 128, 128>}]} {
    %c0 = arith.constant 0 : index
    %c0_0 = arith.constant 0 : index
    %0 = vector.load %arg3[%c0, %c0_0] : memref<128x128xbf16, #tpu.memory_space<vmem>>, vector<128x128xbf16>
    %c0_1 = arith.constant 0 : index
    %c0_2 = arith.constant 0 : index
    %1 = vector.load %arg4[%c0_1, %c0_2] : memref<128x128xbf16, #tpu.memory_space<vmem>>, vector<128x128xbf16>
    %cst = arith.constant dense<0.000000e+00> : vector<128x128xf32>
    %2 = tpu.matmul %0, %1, %cst {dimension_numbers = #tpu.dot_dimension_numbers<[1], [0], [0], [1], [0, 0, 1, 1], [], []>} : vector<128x128xbf16>, vector<128x128xbf16>, vector<128x128xf32> -> vector<128x128xf32>
    %c0_3 = arith.constant 0 : index
    %c0_4 = arith.constant 0 : index
    %3 = vector.load %arg5[%c0_3, %c0_4] : memref<1x128xf32, #tpu.memory_space<vmem>>, vector<1x128xf32>
    %4 = vector.broadcast %3 : vector<1x128xf32> to vector<128x128xf32>
    %5 = arith.mulf %2, %4 : vector<128x128xf32>
    %c0_5 = arith.constant 0 : index
    %c0_6 = arith.constant 0 : index
    %6 = vector.load %arg6[%c0_5, %c0_6] : memref<1x128xf32, #tpu.memory_space<vmem>>, vector<1x128xf32>
    %7 = vector.broadcast %6 : vector<1x128xf32> to vector<128x128xf32>
    %8 = arith.addf %5, %7 : vector<128x128xf32>
    %cst_7 = arith.constant 0.000000e+00 : f32
    %9 = vector.broadcast %cst_7 : f32 to vector<128x128xf32>
    %10 = arith.maximumf %8, %9 : vector<128x128xf32>
    %11 = arith.truncf %10 : vector<128x128xf32> to vector<128x128xbf16>
    %c0_8 = arith.constant 0 : index
    %c0_9 = arith.constant 0 : index
    %12 = vector.load %arg7[%c0_8, %c0_9] : memref<128x128xbf16, #tpu.memory_space<vmem>>, vector<128x128xbf16>
    tpu.vector_store %arg7[%c0_8, %c0_9], %11 {strides = array<i32>} : memref<128x128xbf16, #tpu.memory_space<vmem>>, vector<128x128xbf16>,
    return
  }
  func.func @transform_0(%arg0: i32, %arg1: i32, %arg2: i32) -> (i32, i32) {
    %c0_i32 = arith.constant 0 : i32
    return %arg0, %arg2 : i32, i32
  }
  func.func @transform_1(%arg0: i32, %arg1: i32, %arg2: i32) -> (i32, i32) {
    %c0_i32 = arith.constant 0 : i32
    return %arg2, %arg1 : i32, i32
  }
  func.func @transform_2(%arg0: i32, %arg1: i32, %arg2: i32) -> (i32, i32) {
    %c0_i32 = arith.constant 0 : i32
    %c0_i32_0 = arith.constant 0 : i32
    return %c0_i32, %arg1 : i32, i32
  }
  func.func @transform_3(%arg0: i32, %arg1: i32, %arg2: i32) -> (i32, i32) {
    %c0_i32 = arith.constant 0 : i32
    %c0_i32_0 = arith.constant 0 : i32
    return %c0_i32, %arg1 : i32, i32
  }
  func.func @transform_4(%arg0: i32, %arg1: i32, %arg2: i32) -> (i32, i32) {
    %c0_i32 = arith.constant 0 : i32
    return %arg0, %arg1 : i32, i32
  }
}

module attributes {stable_mosaic.version = 11 : i64} {
  func.func @_fused_matmul_kernel(%arg0: i32, %arg1: i32, %arg2: i32, %arg3: memref<128x128xbf16, #tpu.memory_space<vmem>>, %arg4: memref<128x128xbf16, #tpu.memory_space<vmem>>, %arg5: memref<128x128xbf16, #tpu.memory_space<vmem>>, %arg6: memref<1xf32, #tpu.memory_space<smem>>, %arg7: memref<128x128xbf16, #tpu.memory_space<vmem>>) attributes {dimension_semantics = [#tpu.dimension_semantics<parallel>, #tpu.dimension_semantics<parallel>, #tpu.dimension_semantics<arbitrary>], iteration_bounds = array<i64: 1, 1, 1>, scalar_prefetch = 0 : i64, scratch_operands = 0 : i64, tpu.core_type = #tpu.core_type<tc>, window_params = [{transform_indices = @transform_0, window_bounds = array<i64: 128, 128>}, {transform_indices = @transform_1, window_bounds = array<i64: 128, 128>}, {transform_indices = @transform_2, window_bounds = array<i64: 128, 128>}, {transform_indices = @transform_3, window_bounds = array<i64: 1>}, {transform_indices = @transform_4, window_bounds = array<i64: 128, 128>}]} {
    %c0 = arith.constant 0 : index
    %c0_0 = arith.constant 0 : index
    %0 = vector.load %arg3[%c0, %c0_0] : memref<128x128xbf16, #tpu.memory_space<vmem>>, vector<128x128xbf16>
    %c0_1 = arith.constant 0 : index
    %c0_2 = arith.constant 0 : index
    %1 = vector.load %arg4[%c0_1, %c0_2] : memref<128x128xbf16, #tpu.memory_space<vmem>>, vector<128x128xbf16>
    %cst = arith.constant dense<0.000000e+00> : vector<128x128xf32>
    %2 = tpu.matmul %0, %1, %cst {dimension_numbers = #tpu.dot_dimension_numbers<[1], [0], [0], [1], [0, 0, 1, 1], [], []>} : vector<128x128xbf16>, vector<128x128xbf16>, vector<128x128xf32> -> vector<128x128xf32>
    %c0_3 = arith.constant 0 : index
    %3 = memref.load %arg6[%c0_3] : memref<1xf32, #tpu.memory_space<smem>>
    %c0_4 = arith.constant 0 : index
    %c0_5 = arith.constant 0 : index
    %4 = vector.load %arg5[%c0_4, %c0_5] : memref<128x128xbf16, #tpu.memory_space<vmem>>, vector<128x128xbf16>
    %5 = arith.extf %4 : vector<128x128xbf16> to vector<128x128xf32>
    %6 = vector.broadcast %3 : f32 to vector<128x128xf32>
    %7 = arith.mulf %6, %5 : vector<128x128xf32>
    %8 = arith.addf %2, %7 : vector<128x128xf32>
    %9 = arith.truncf %8 : vector<128x128xf32> to vector<128x128xbf16>
    %c0_6 = arith.constant 0 : index
    %c0_7 = arith.constant 0 : index
    %10 = vector.load %arg7[%c0_6, %c0_7] : memref<128x128xbf16, #tpu.memory_space<vmem>>, vector<128x128xbf16>
    tpu.vector_store %arg7[%c0_6, %c0_7], %9 {strides = array<i32>} : memref<128x128xbf16, #tpu.memory_space<vmem>>, vector<128x128xbf16>,
    return
  }
  func.func @transform_0(%arg0: i32, %arg1: i32, %arg2: i32) -> (i32, i32) {
    %c0_i32 = arith.constant 0 : i32
    return %arg0, %arg2 : i32, i32
  }
  func.func @transform_1(%arg0: i32, %arg1: i32, %arg2: i32) -> (i32, i32) {
    %c0_i32 = arith.constant 0 : i32
    return %arg2, %arg1 : i32, i32
  }
  func.func @transform_2(%arg0: i32, %arg1: i32, %arg2: i32) -> (i32, i32) {
    %c0_i32 = arith.constant 0 : i32
    return %arg0, %arg1 : i32, i32
  }
  func.func @transform_3(%arg0: i32, %arg1: i32, %arg2: i32) -> i32 {
    %c0_i32 = arith.constant 0 : i32
    %c0_i32_0 = arith.constant 0 : i32
    return %c0_i32 : i32
  }
  func.func @transform_4(%arg0: i32, %arg1: i32, %arg2: i32) -> (i32, i32) {
    %c0_i32 = arith.constant 0 : i32
    return %arg0, %arg1 : i32, i32
  }
}

module attributes {stable_mosaic.version = 11 : i64} {
  func.func @_fused_matmul_kernel(%arg0: i32, %arg1: i32, %arg2: i32, %arg3: memref<16x128xbf16, #tpu.memory_space<vmem>>, %arg4: memref<128x128xbf16, #tpu.memory_space<vmem>>, %arg5: memref<16x128xbf16, #tpu.memory_space<vmem>>, %arg6: memref<1xf32, #tpu.memory_space<smem>>, %arg7: memref<16x128xbf16, #tpu.memory_space<vmem>>) attributes {dimension_semantics = [#tpu.dimension_semantics<parallel>, #tpu.dimension_semantics<parallel>, #tpu.dimension_semantics<arbitrary>], iteration_bounds = array<i64: 1, 1, 1>, scalar_prefetch = 0 : i64, scratch_operands = 0 : i64, tpu.core_type = #tpu.core_type<tc>, window_params = [{transform_indices = @transform_0, window_bounds = array<i64: 16, 128>}, {transform_indices = @transform_1, window_bounds = array<i64: 128, 128>}, {transform_indices = @transform_2, window_bounds = array<i64: 16, 128>}, {transform_indices = @transform_3, window_bounds = array<i64: 1>}, {transform_indices = @transform_4, window_bounds = array<i64: 16, 128>}]} {
    %c0 = arith.constant 0 : index
    %c0_0 = arith.constant 0 : index
    %0 = vector.load %arg3[%c0, %c0_0] : memref<16x128xbf16, #tpu.memory_space<vmem>>, vector<16x128xbf16>
    %c0_1 = arith.constant 0 : index
    %c0_2 = arith.constant 0 : index
    %1 = vector.load %arg4[%c0_1, %c0_2] : memref<128x128xbf16, #tpu.memory_space<vmem>>, vector<128x128xbf16>
    %cst = arith.constant dense<0.000000e+00> : vector<16x128xf32>
    %2 = tpu.matmul %0, %1, %cst {dimension_numbers = #tpu.dot_dimension_numbers<[1], [0], [0], [1], [0, 0, 1, 1], [], []>} : vector<16x128xbf16>, vector<128x128xbf16>, vector<16x128xf32> -> vector<16x128xf32>
    %c0_3 = arith.constant 0 : index
    %3 = memref.load %arg6[%c0_3] : memref<1xf32, #tpu.memory_space<smem>>
    %c0_4 = arith.constant 0 : index
    %c0_5 = arith.constant 0 : index
    %4 = vector.load %arg5[%c0_4, %c0_5] : memref<16x128xbf16, #tpu.memory_space<vmem>>, vector<16x128xbf16>
    %5 = arith.extf %4 : vector<16x128xbf16> to vector<16x128xf32>
    %6 = vector.broadcast %3 : f32 to vector<16x128xf32>
    %7 = arith.mulf %6, %5 : vector<16x128xf32>
    %8 = arith.addf %2, %7 : vector<16x128xf32>
    %9 = arith.truncf %8 : vector<16x128xf32> to vector<16x128xbf16>
    %c0_6 = arith.constant 0 : index
    %c0_7 = arith.constant 0 : index
    %10 = vector.load %arg7[%c0_6, %c0_7] : memref<16x128xbf16, #tpu.memory_space<vmem>>, vector<16x128xbf16>
    tpu.vector_store %arg7[%c0_6, %c0_7], %9 {strides = array<i32>} : memref<16x128xbf16, #tpu.memory_space<vmem>>, vector<16x128xbf16>,
    return
  }
  func.func @transform_0(%arg0: i32, %arg1: i32, %arg2: i32) -> (i32, i32) {
    %c0_i32 = arith.constant 0 : i32
    return %arg0, %arg2 : i32, i32
  }
  func.func @transform_1(%arg0: i32, %arg1: i32, %arg2: i32) -> (i32, i32) {
    %c0_i32 = arith.constant 0 : i32
    return %arg2, %arg1 : i32, i32
  }
  func.func @transform_2(%arg0: i32, %arg1: i32, %arg2: i32) -> (i32, i32) {
    %c0_i32 = arith.constant 0 : i32
    return %arg0, %arg1 : i32, i32
  }
  func.func @transform_3(%arg0: i32, %arg1: i32, %arg2: i32) -> i32 {
    %c0_i32 = arith.constant 0 : i32
    %c0_i32_0 = arith.constant 0 : i32
    return %c0_i32 : i32
  }
  func.func @transform_4(%arg0: i32, %arg1: i32, %arg2: i32) -> (i32, i32) {
    %c0_i32 = arith.constant 0 : i32
    return %arg0, %arg1 : i32, i32
  }
}

module attributes {stable_mosaic.version = 11 : i64} {
  func.func @_fused_matmul_kernel(%arg0: i32, %arg1: i32, %arg2: i32, %arg3: memref<128x128xbf16, #tpu.memory_space<vmem>>, %arg4: memref<128x128xbf16, #tpu.memory_space<vmem>>, %arg5: memref<1x128xf32, #tpu.memory_space<vmem>>, %arg6: memref<1x128xf32, #tpu.memory_space<vmem>>, %arg7: memref<128x128xbf16, #tpu.memory_space<vmem>>) attributes {dimension_semantics = [#tpu.dimension_semantics<parallel>, #tpu.dimension_semantics<parallel>, #tpu.dimension_semantics<arbitrary>], iteration_bounds = array<i64: 1, 1, 1>, scalar_prefetch = 0 : i64, scratch_operands = 0 : i64, tpu.core_type = #tpu.core_type<tc>, window_params = [{transform_indices = @transform_0, window_bounds = array<i64: 128, 128>}, {transform_indices = @transform_1, window_bounds = array<i64: 128, 128>}, {transform_indices = @transform_2, window_bounds = array<i64: 1, 128>}, {transform_indices = @transform_3, window_bounds = array<i64: 1, 128>}, {transform_indices = @transform_4, window_bounds = array<i64: 128, 128>}]} {
    %c0 = arith.constant 0 : index
    %c0_0 = arith.constant 0 : index
    %0 = vector.load %arg3[%c0, %c0_0] : memref<128x128xbf16, #tpu.memory_space<vmem>>, vector<128x128xbf16>
    %c0_1 = arith.constant 0 : index
    %c0_2 = arith.constant 0 : index
    %1 = vector.load %arg4[%c0_1, %c0_2] : memref<128x128xbf16, #tpu.memory_space<vmem>>, vector<128x128xbf16>
    %cst = arith.constant dense<0.000000e+00> : vector<128x128xf32>
    %2 = tpu.matmul %0, %1, %cst {dimension_numbers = #tpu.dot_dimension_numbers<[1], [0], [0], [1], [0, 0, 1, 1], [], []>} : vector<128x128xbf16>, vector<128x128xbf16>, vector<128x128xf32> -> vector<128x128xf32>
    %c0_3 = arith.constant 0 : index
    %c0_4 = arith.constant 0 : index
    %3 = vector.load %arg5[%c0_3, %c0_4] : memref<1x128xf32, #tpu.memory_space<vmem>>, vector<1x128xf32>
    %4 = vector.broadcast %3 : vector<1x128xf32> to vector<128x128xf32>
    %5 = arith.mulf %2, %4 : vector<128x128xf32>
    %c0_5 = arith.constant 0 : index
    %c0_6 = arith.constant 0 : index
    %6 = vector.load %arg6[%c0_5, %c0_6] : memref<1x128xf32, #tpu.memory_space<vmem>>, vector<1x128xf32>
    %7 = vector.broadcast %6 : vector<1x128xf32> to vector<128x128xf32>
    %8 = arith.addf %5, %7 : vector<128x128xf32>
    %9 = arith.truncf %8 : vector<128x128xf32> to vector<128x128xbf16>
    %c0_7 = arith.constant 0 : index
    %c0_8 = arith.constant 0 : index
    %10 = vector.load %arg7[%c0_7, %c0_8] : memref<128x128xbf16, #tpu.memory_space<vmem>>, vector<128x128xbf16>
    tpu.vector_store %arg7[%c0_7, %c0_8], %9 {strides = array<i32>} : memref<128x128xbf16, #tpu.memory_space<vmem>>, vector<128x128xbf16>,
    return
  }
  func.func @transform_0(%arg0: i32, %arg1: i32, %arg2: i32) -> (i32, i32) {
    %c0_i32 = arith.constant 0 : i32
    return %arg0, %arg2 : i32, i32
  }
  func.func @transform_1(%arg0: i32, %arg1: i32, %arg2: i32) -> (i32, i32) {
    %c0_i32 = arith.constant 0 : i32
    return %arg2, %arg1 : i32, i32
  }
  func.func @transform_2(%arg0: i32, %arg1: i32, %arg2: i32) -> (i32, i32) {
    %c0_i32 = arith.constant 0 : i32
    %c0_i32_0 = arith.constant 0 : i32
    return %c0_i32, %arg1 : i32, i32
  }
  func.func @transform_3(%arg0: i32, %arg1: i32, %arg2: i32) -> (i32, i32) {
    %c0_i32 = arith.constant 0 : i32
    %c0_i32_0 = arith.constant 0 : i32
    return %c0_i32, %arg1 : i32, i32
  }
  func.func @transform_4(%arg0: i32, %arg1: i32, %arg2: i32) -> (i32, i32) {
    %c0_i32 = arith.constant 0 : i32
    return %arg0, %arg1 : i32, i32
  }
}

module attributes {stable_mosaic.version = 11 : i64} {
  func.func @_fused_matmul_kernel(%arg0: i32, %arg1: i32, %arg2: i32, %arg3: memref<16x128xbf16, #tpu.memory_space<vmem>>, %arg4: memref<128x128xbf16, #tpu.memory_space<vmem>>, %arg5: memref<16x128xf32, #tpu.memory_space<vmem>>) attributes {dimension_semantics = [#tpu.dimension_semantics<parallel>, #tpu.dimension_semantics<parallel>, #tpu.dimension_semantics<arbitrary>], iteration_bounds = array<i64: 1, 1, 1>, scalar_prefetch = 0 : i64, scratch_operands = 0 : i64, tpu.core_type = #tpu.core_type<tc>, window_params = [{transform_indices = @transform_0, window_bounds = array<i64: 16, 128>}, {transform_indices = @transform_1, window_bounds = array<i64: 128, 128>}, {transform_indices = @transform_2, window_bounds = array<i64: 16, 128>}]} {
    %c0 = arith.constant 0 : index
    %c0_0 = arith.constant 0 : index
    %0 = vector.load %arg3[%c0, %c0_0] : memref<16x128xbf16, #tpu.memory_space<vmem>>, vector<16x128xbf16>
    %c0_1 = arith.constant 0 : index
    %c0_2 = arith.constant 0 : index
    %1 = vector.load %arg4[%c0_1, %c0_2] : memref<128x128xbf16, #tpu.memory_space<vmem>>, vector<128x128xbf16>
    %cst = arith.constant dense<0.000000e+00> : vector<16x128xf32>
    %2 = tpu.matmul %0, %1, %cst {dimension_numbers = #tpu.dot_dimension_numbers<[1], [0], [0], [1], [0, 0, 1, 1], [], []>} : vector<16x128xbf16>, vector<128x128xbf16>, vector<16x128xf32> -> vector<16x128xf32>
    %c0_3 = arith.constant 0 : index
    %c0_4 = arith.constant 0 : index
    %3 = vector.load %arg5[%c0_3, %c0_4] : memref<16x128xf32, #tpu.memory_space<vmem>>, vector<16x128xf32>
    tpu.vector_store %arg5[%c0_3, %c0_4], %2 {strides = array<i32>} : memref<16x128xf32, #tpu.memory_space<vmem>>, vector<16x128xf32>,
    return
  }
  func.func @transform_0(%arg0: i32, %arg1: i32, %arg2: i32) -> (i32, i32) {
    %c0_i32 = arith.constant 0 : i32
    return %arg0, %arg2 : i32, i32
  }
  func.func @transform_1(%arg0: i32, %arg1: i32, %arg2: i32) -> (i32, i32) {
    %c0_i32 = arith.constant 0 : i32
    return %arg2, %arg1 : i32, i32
  }
  func.func @transform_2(%arg0: i32, %arg1: i32, %arg2: i32) -> (i32, i32) {
    %c0_i32 = arith.constant 0 : i32
    return %arg0, %arg1 : i32, i32
  }
}

</mosaic_0001>

<llo_original>
// kernel: gin_virtualnode_forward.15
$region0: #{gin_virtualnode_forward.15}
  #allocation0 [shape = 'u32[]', space=smem, size = 0x4, offset = 0x4, fixed_abs, tag = 'smem constant byte address 0x4 - core index']
  #allocation1 [shape = 'u32[72,128]{1,0:T(1,128)}', space=vmem, size = 0x9000, scoped, tag = 'internal scratch']
  #allocation2 [shape = 'f32[1]{0:T(128)S(6)}', space=smem, size = 0x200, scoped, tag = 'scoped memory for gin_virtualnode_forward.15']
  %s0 = inlined_call_operand.vmem [shape: bf16[16,128], index: 0, kind: input, shape index: {}]
  %s1 = inlined_call_operand.vmem [shape: bf16[128,128], index: 1, kind: input, shape index: {}]
  %s2 = inlined_call_operand.vmem [shape: bf16[16,128], index: 2, kind: input, shape index: {}]
  %s3 = inlined_call_operand.<no memory space> [shape: f32[1], index: 3, kind: input, shape index: {}]
  %s4 = inlined_call_operand.vmem [shape: bf16[16,128], index: 4, kind: output, shape index: {}]
  %s5 = sld [smem:[#allocation0]]
  $region26: #{gin_virtualnode_forward.15} parent=0
    _
  %s7 = ssub.s32 1, %s5
  %s8 = scalar_select 0, %s7, %s5
  %9 = sst [smem:[#allocation2]] %s3
  // Predicated region
  $region2: #{gin_virtualnode_forward.15} parent=0 // pred_check
    _
  $region3: #{gin_virtualnode_forward.15} parent=0 // pred_check_branch
    %11 = sbr.rel (0) target = $region5
  $region4: #{gin_virtualnode_forward.15} parent=0 // pred_region
    _
  $region5: #{gin_virtualnode_forward.15} parent=0 // pred_fallthru
    _
  // Predicated region
  $region6: #{gin_virtualnode_forward.15} parent=0 // pred_check
    _
  $region7: #{gin_virtualnode_forward.15} parent=0 // pred_check_branch
    %13 = sbr.rel (0) target = $region9
  $region8: #{gin_virtualnode_forward.15} parent=0 // pred_region
    _
  $region9: #{gin_virtualnode_forward.15} parent=0 // pred_fallthru
    _
  // Predicated region
  $region10: #{gin_virtualnode_forward.15} parent=0 // pred_check
    _
  $region11: #{gin_virtualnode_forward.15} parent=0 // pred_check_branch
    %15 = sbr.rel (0) target = $region13
  $region12: #{gin_virtualnode_forward.15} parent=0 // pred_region
    _
  $region13: #{gin_virtualnode_forward.15} parent=0 // pred_fallthru
    _
  // Predicated region
  $region14: #{gin_virtualnode_forward.15} parent=0 // pred_check
    _
  $region15: #{gin_virtualnode_forward.15} parent=0 // pred_check_branch
    %17 = sbr.rel (0) target = $region17
  $region16: #{gin_virtualnode_forward.15} parent=0 // pred_region
    _
  $region17: #{gin_virtualnode_forward.15} parent=0 // pred_fallthru
    _
  %v18 = vld [vmem:[%s0] sm:$0xf]
  %v19 = vld [vmem:[%s0 + $0x4] sm:$0xf]
  %v20 = vld [vmem:[%s1] sm:$0xf]
  %v21 = vld [vmem:[%s1 + $0x4] sm:$0xf]
  %v22 = vld [vmem:[%s1 + $0x8] sm:$0xf]
  %v23 = vld [vmem:[%s1 + $0xc] sm:$0xf]
  %v24 = vld [vmem:[%s1 + $0x10] sm:$0xf]
  %v25 = vld [vmem:[%s1 + $0x14] sm:$0xf]
  %v26 = vld [vmem:[%s1 + $0x18] sm:$0xf]
  %v27 = vld [vmem:[%s1 + $0x1c] sm:$0xf]
  %v28 = vld [vmem:[%s1 + $0x20] sm:$0xf]
  %v29 = vld [vmem:[%s1 + $0x24] sm:$0xf]
  %v30 = vld [vmem:[%s1 + $0x28] sm:$0xf]
  %v31 = vld [vmem:[%s1 + $0x2c] sm:$0xf]
  %v32 = vld [vmem:[%s1 + $0x30] sm:$0xf]
  %v33 = vld [vmem:[%s1 + $0x34] sm:$0xf]
  %v34 = vld [vmem:[%s1 + $0x38] sm:$0xf]
  %v35 = vld [vmem:[%s1 + $0x3c] sm:$0xf]
  %s36 = sld [smem:[#allocation2]]
  %v37 = vld [vmem:[%s2] sm:$0xf]
  %v38 = vld [vmem:[%s2 + $0x4] sm:$0xf]
  %v39 = vunpack.c.l.bf16 %v37
  %v40 = vunpack.c.l.bf16 %v38
  %v41 = vstv %s36
  %v42 = vmul.f32 %v41, %v39
  %v43 = vmul.f32 %v41, %v40
  %v46 = vunpack.c.l.b16 %v18
  %v47 = vunpack.c.l.b16 %v19
  %v48 = vpack.c.b16 %v47, %v46
  %v66 = vunpack.c.l.b16 %v20
  %v67 = vunpack.c.l.b16 %v21
  %v68 = vunpack.c.l.b16 %v22
  %v69 = vunpack.c.l.b16 %v23
  %v70 = vunpack.c.l.b16 %v24
  %v71 = vunpack.c.l.b16 %v25
  %v72 = vunpack.c.l.b16 %v26
  %v73 = vunpack.c.l.b16 %v27
  %v74 = vunpack.c.l.b16 %v28
  %v75 = vunpack.c.l.b16 %v29
  %v76 = vunpack.c.l.b16 %v30
  %v77 = vunpack.c.l.b16 %v31
  %v78 = vunpack.c.l.b16 %v32
  %v79 = vunpack.c.l.b16 %v33
  %v80 = vunpack.c.l.b16 %v34
  %v81 = vunpack.c.l.b16 %v35
  %v82 = vpack.c.b16 %v67, %v66
  %v83 = vpack.c.b16 %v69, %v68
  %v84 = vpack.c.b16 %v71, %v70
  %v85 = vpack.c.b16 %v73, %v72
  %v86 = vpack.c.b16 %v75, %v74
  %v87 = vpack.c.b16 %v77, %v76
  %v88 = vpack.c.b16 %v79, %v78
  %v89 = vpack.c.b16 %v81, %v80
  %98 = vmatpush.bf16.msra.mxu0 %v89
  %99 = vmatpush.bf16.msra.mxu0 %v88
  %100 = vmatpush.bf16.msra.mxu0 %v87
  %101 = vmatpush.bf16.msra.mxu0 %v86
  %102 = vmatpush.bf16.msra.mxu0 %v85
  %103 = vmatpush.bf16.msra.mxu0 %v84
  %104 = vmatpush.bf16.msra.mxu0 %v83
  %105 = vmatpush.bf16.msra.mxu0 %v82
  %106 = vmatmul.bf16.gmra.mxu0 %v48
  %v107 = vpop.f32.mrf.mxu0
  %v108 = vadd.f32 %v42, %v107
  %v109 = vpop.f32.mrf.mxu0
  %v110 = vadd.f32 %v43, %v109
  %111 = vdwg.mxu0
  %v112 = vpack.c.bf16 %v108, %v108
  %v113 = vpack.c.bf16 %v110, %v110
  %114 = vst [vmem:[%s4] sm:$0xf] %v112
  %115 = vst [vmem:[%s4 + $0x4] sm:$0xf] %v113
  // Predicated region
  $region18: #{gin_virtualnode_forward.15} parent=0 // pred_check
    _
  $region19: #{gin_virtualnode_forward.15} parent=0 // pred_check_branch
    %117 = sbr.rel (0) target = $region21
  $region20: #{gin_virtualnode_forward.15} parent=0 // pred_region
    _
  $region21: #{gin_virtualnode_forward.15} parent=0 // pred_fallthru
    _
  // Predicated region
  $region22: #{gin_virtualnode_forward.15} parent=0 // pred_check
    _
  $region23: #{gin_virtualnode_forward.15} parent=0 // pred_check_branch
    %119 = sbr.rel (0) target = $region25
  $region24: #{gin_virtualnode_forward.15} parent=0 // pred_region
    _
  $region25: #{gin_virtualnode_forward.15} parent=0 // pred_fallthru
    _

// kernel: gin_virtualnode_forward.13
$region0: #{gin_virtualnode_forward.13}
  #allocation0 [shape = 'u32[]', space=smem, size = 0x4, offset = 0x4, fixed_abs, tag = 'smem constant byte address 0x4 - core index']
  #allocation1 [shape = 'u32[72,128]{1,0:T(1,128)}', space=vmem, size = 0x9000, scoped, tag = 'internal scratch']
  %s0 = inlined_call_operand.vmem [shape: bf16[128,128], index: 0, kind: input, shape index: {}]
  %s1 = inlined_call_operand.vmem [shape: bf16[128,128], index: 1, kind: input, shape index: {}]
  %s2 = inlined_call_operand.vmem [shape: f32[1,128], index: 2, kind: input, shape index: {}]
  %s3 = inlined_call_operand.vmem [shape: f32[1,128], index: 3, kind: input, shape index: {}]
  %s4 = inlined_call_operand.vmem [shape: bf16[128,128], index: 4, kind: output, shape index: {}]
  %s5 = sld [smem:[#allocation0]]
  $region26: #{gin_virtualnode_forward.13} parent=0
    _
  %s7 = ssub.s32 1, %s5
  %s8 = scalar_select 0, %s7, %s5
  // Predicated region
  $region2: #{gin_virtualnode_forward.13} parent=0 // pred_check
    _
  $region3: #{gin_virtualnode_forward.13} parent=0 // pred_check_branch
    %10 = sbr.rel (0) target = $region5
  $region4: #{gin_virtualnode_forward.13} parent=0 // pred_region
    _
  $region5: #{gin_virtualnode_forward.13} parent=0 // pred_fallthru
    _
  // Predicated region
  $region6: #{gin_virtualnode_forward.13} parent=0 // pred_check
    _
  $region7: #{gin_virtualnode_forward.13} parent=0 // pred_check_branch
    %12 = sbr.rel (0) target = $region9
  $region8: #{gin_virtualnode_forward.13} parent=0 // pred_region
    _
  $region9: #{gin_virtualnode_forward.13} parent=0 // pred_fallthru
    _
  // Predicated region
  $region10: #{gin_virtualnode_forward.13} parent=0 // pred_check
    _
  $region11: #{gin_virtualnode_forward.13} parent=0 // pred_check_branch
    %14 = sbr.rel (0) target = $region13
  $region12: #{gin_virtualnode_forward.13} parent=0 // pred_region
    _
  $region13: #{gin_virtualnode_forward.13} parent=0 // pred_fallthru
    _
  // Predicated region
  $region14: #{gin_virtualnode_forward.13} parent=0 // pred_check
    _
  $region15: #{gin_virtualnode_forward.13} parent=0 // pred_check_branch
    %16 = sbr.rel (0) target = $region17
  $region16: #{gin_virtualnode_forward.13} parent=0 // pred_region
    _
  $region17: #{gin_virtualnode_forward.13} parent=0 // pred_fallthru
    _
  %v17 = vld [vmem:[%s0] sm:$0xf]
  %v18 = vld [vmem:[%s0 + $0x4] sm:$0xf]
  %v19 = vld [vmem:[%s0 + $0x8] sm:$0xf]
  %v20 = vld [vmem:[%s0 + $0xc] sm:$0xf]
  %v21 = vld [vmem:[%s0 + $0x10] sm:$0xf]
  %v22 = vld [vmem:[%s0 + $0x14] sm:$0xf]
  %v23 = vld [vmem:[%s0 + $0x18] sm:$0xf]
  %v24 = vld [vmem:[%s0 + $0x1c] sm:$0xf]
  %v25 = vld [vmem:[%s0 + $0x20] sm:$0xf]
  %v26 = vld [vmem:[%s0 + $0x24] sm:$0xf]
  %v27 = vld [vmem:[%s0 + $0x28] sm:$0xf]
  %v28 = vld [vmem:[%s0 + $0x2c] sm:$0xf]
  %v29 = vld [vmem:[%s0 + $0x30] sm:$0xf]
  %v30 = vld [vmem:[%s0 + $0x34] sm:$0xf]
  %v31 = vld [vmem:[%s0 + $0x38] sm:$0xf]
  %v32 = vld [vmem:[%s0 + $0x3c] sm:$0xf]
  %v33 = vld [vmem:[%s1] sm:$0xf]
  %v34 = vld [vmem:[%s1 + $0x4] sm:$0xf]
  %v35 = vld [vmem:[%s1 + $0x8] sm:$0xf]
  %v36 = vld [vmem:[%s1 + $0xc] sm:$0xf]
  %v37 = vld [vmem:[%s1 + $0x10] sm:$0xf]
  %v38 = vld [vmem:[%s1 + $0x14] sm:$0xf]
  %v39 = vld [vmem:[%s1 + $0x18] sm:$0xf]
  %v40 = vld [vmem:[%s1 + $0x1c] sm:$0xf]
  %v41 = vld [vmem:[%s1 + $0x20] sm:$0xf]
  %v42 = vld [vmem:[%s1 + $0x24] sm:$0xf]
  %v43 = vld [vmem:[%s1 + $0x28] sm:$0xf]
  %v44 = vld [vmem:[%s1 + $0x2c] sm:$0xf]
  %v45 = vld [vmem:[%s1 + $0x30] sm:$0xf]
  %v46 = vld [vmem:[%s1 + $0x34] sm:$0xf]
  %v47 = vld [vmem:[%s1 + $0x38] sm:$0xf]
  %v48 = vld [vmem:[%s1 + $0x3c] sm:$0xf]
  %v65 = vunpack.c.l.b16 %v17
  %v66 = vunpack.c.l.b16 %v18
  %v67 = vunpack.c.l.b16 %v19
  %v68 = vunpack.c.l.b16 %v20
  %v69 = vunpack.c.l.b16 %v21
  %v70 = vunpack.c.l.b16 %v22
  %v71 = vunpack.c.l.b16 %v23
  %v72 = vunpack.c.l.b16 %v24
  %v73 = vunpack.c.l.b16 %v25
  %v74 = vunpack.c.l.b16 %v26
  %v75 = vunpack.c.l.b16 %v27
  %v76 = vunpack.c.l.b16 %v28
  %v77 = vunpack.c.l.b16 %v29
  %v78 = vunpack.c.l.b16 %v30
  %v79 = vunpack.c.l.b16 %v31
  %v80 = vunpack.c.l.b16 %v32
  %v81 = vpack.c.b16 %v66, %v65
  %v82 = vpack.c.b16 %v68, %v67
  %v83 = vpack.c.b16 %v70, %v69
  %v84 = vpack.c.b16 %v72, %v71
  %v85 = vpack.c.b16 %v74, %v73
  %v86 = vpack.c.b16 %v76, %v75
  %v87 = vpack.c.b16 %v78, %v77
  %v88 = vpack.c.b16 %v80, %v79
  %v113 = vunpack.c.l.b16 %v33
  %v114 = vunpack.c.l.b16 %v34
  %v115 = vunpack.c.l.b16 %v35
  %v116 = vunpack.c.l.b16 %v36
  %v117 = vunpack.c.l.b16 %v37
  %v118 = vunpack.c.l.b16 %v38
  %v119 = vunpack.c.l.b16 %v39
  %v120 = vunpack.c.l.b16 %v40
  %v121 = vunpack.c.l.b16 %v41
  %v122 = vunpack.c.l.b16 %v42
  %v123 = vunpack.c.l.b16 %v43
  %v124 = vunpack.c.l.b16 %v44
  %v125 = vunpack.c.l.b16 %v45
  %v126 = vunpack.c.l.b16 %v46
  %v127 = vunpack.c.l.b16 %v47
  %v128 = vunpack.c.l.b16 %v48
  %v129 = vpack.c.b16 %v114, %v113
  %v130 = vpack.c.b16 %v116, %v115
  %v131 = vpack.c.b16 %v118, %v117
  %v132 = vpack.c.b16 %v120, %v119
  %v133 = vpack.c.b16 %v122, %v121
  %v134 = vpack.c.b16 %v124, %v123
  %v135 = vpack.c.b16 %v126, %v125
  %v136 = vpack.c.b16 %v128, %v127
  %145 = vmatpush.bf16.msra.mxu0 %v136
  %146 = vmatpush.bf16.msra.mxu0 %v135
  %147 = vmatpush.bf16.msra.mxu0 %v134
  %148 = vmatpush.bf16.msra.mxu0 %v133
  %149 = vmatpush.bf16.msra.mxu0 %v132
  %150 = vmatpush.bf16.msra.mxu0 %v131
  %151 = vmatpush.bf16.msra.mxu0 %v130
  %152 = vmatpush.bf16.msra.mxu0 %v129
  %153 = vmatmul.bf16.gmra.mxu0 %v81
  %v154 = vpop.f32.mrf.mxu0
  %v155 = vadd.f32 0.0, %v154
  %v156 = vpop.f32.mrf.mxu0
  %v157 = vadd.f32 0.0, %v156
  %158 = vmatmul.bf16.gmra.mxu0 %v82
  %v159 = vpop.f32.mrf.mxu0
  %v160 = vadd.f32 0.0, %v159
  %v161 = vpop.f32.mrf.mxu0
  %v162 = vadd.f32 0.0, %v161
  %163 = vmatmul.bf16.gmra.mxu0 %v83
  %v164 = vpop.f32.mrf.mxu0
  %v165 = vadd.f32 0.0, %v164
  %v166 = vpop.f32.mrf.mxu0
  %v167 = vadd.f32 0.0, %v166
  %168 = vmatmul.bf16.gmra.mxu0 %v84
  %v169 = vpop.f32.mrf.mxu0
  %v170 = vadd.f32 0.0, %v169
  %v171 = vpop.f32.mrf.mxu0
  %v172 = vadd.f32 0.0, %v171
  %173 = vmatmul.bf16.gmra.mxu0 %v85
  %v174 = vpop.f32.mrf.mxu0
  %v175 = vadd.f32 0.0, %v174
  %v176 = vpop.f32.mrf.mxu0
  %v177 = vadd.f32 0.0, %v176
  %178 = vmatmul.bf16.gmra.mxu0 %v86
  %v179 = vpop.f32.mrf.mxu0
  %v180 = vadd.f32 0.0, %v179
  %v181 = vpop.f32.mrf.mxu0
  %v182 = vadd.f32 0.0, %v181
  %183 = vmatmul.bf16.gmra.mxu0 %v87
  %v184 = vpop.f32.mrf.mxu0
  %v185 = vadd.f32 0.0, %v184
  %v186 = vpop.f32.mrf.mxu0
  %v187 = vadd.f32 0.0, %v186
  %188 = vmatmul.bf16.gmra.mxu0 %v88
  %v189 = vpop.f32.mrf.mxu0
  %v190 = vadd.f32 0.0, %v189
  %v191 = vpop.f32.mrf.mxu0
  %v192 = vadd.f32 0.0, %v191
  %193 = vdwg.mxu0
  %v194 = vld [vmem:[%s2] sm:$0x1]
  %v196 = vperm.slane %v194, 0
  %v198 = vmul.f32 %v155, %v196
  %v199 = vmul.f32 %v157, %v196
  %v200 = vmul.f32 %v160, %v196
  %v201 = vmul.f32 %v162, %v196
  %v202 = vmul.f32 %v165, %v196
  %v203 = vmul.f32 %v167, %v196
  %v204 = vmul.f32 %v170, %v196
  %v205 = vmul.f32 %v172, %v196
  %v206 = vmul.f32 %v175, %v196
  %v207 = vmul.f32 %v177, %v196
  %v208 = vmul.f32 %v180, %v196
  %v209 = vmul.f32 %v182, %v196
  %v210 = vmul.f32 %v185, %v196
  %v211 = vmul.f32 %v187, %v196
  %v212 = vmul.f32 %v190, %v196
  %v213 = vmul.f32 %v192, %v196
  %v214 = vld [vmem:[%s3] sm:$0x1]
  %v216 = vperm.slane %v214, 0
  %v218 = vadd.f32 %v198, %v216
  %v219 = vadd.f32 %v199, %v216
  %v220 = vadd.f32 %v200, %v216
  %v221 = vadd.f32 %v201, %v216
  %v222 = vadd.f32 %v202, %v216
  %v223 = vadd.f32 %v203, %v216
  %v224 = vadd.f32 %v204, %v216
  %v225 = vadd.f32 %v205, %v216
  %v226 = vadd.f32 %v206, %v216
  %v227 = vadd.f32 %v207, %v216
  %v228 = vadd.f32 %v208, %v216
  %v229 = vadd.f32 %v209, %v216
  %v230 = vadd.f32 %v210, %v216
  %v231 = vadd.f32 %v211, %v216
  %v232 = vadd.f32 %v212, %v216
  %v233 = vadd.f32 %v213, %v216
  %v234 = vmax.f32 %v218, 0.0
  %v235 = vmax.f32 %v219, 0.0
  %v236 = vmax.f32 %v220, 0.0
  %v237 = vmax.f32 %v221, 0.0
  %v238 = vmax.f32 %v222, 0.0
  %v239 = vmax.f32 %v223, 0.0
  %v240 = vmax.f32 %v224, 0.0
  %v241 = vmax.f32 %v225, 0.0
  %v242 = vmax.f32 %v226, 0.0
  %v243 = vmax.f32 %v227, 0.0
  %v244 = vmax.f32 %v228, 0.0
  %v245 = vmax.f32 %v229, 0.0
  %v246 = vmax.f32 %v230, 0.0
  %v247 = vmax.f32 %v231, 0.0
  %v248 = vmax.f32 %v232, 0.0
  %v249 = vmax.f32 %v233, 0.0
  %v250 = vpack.c.bf16 %v234, %v234
  %v251 = vpack.c.bf16 %v235, %v235
  %v252 = vpack.c.bf16 %v236, %v236
  %v253 = vpack.c.bf16 %v237, %v237
  %v254 = vpack.c.bf16 %v238, %v238
  %v255 = vpack.c.bf16 %v239, %v239
  %v256 = vpack.c.bf16 %v240, %v240
  %v257 = vpack.c.bf16 %v241, %v241
  %v258 = vpack.c.bf16 %v242, %v242
  %v259 = vpack.c.bf16 %v243, %v243
  %v260 = vpack.c.bf16 %v244, %v244
  %v261 = vpack.c.bf16 %v245, %v245
  %v262 = vpack.c.bf16 %v246, %v246
  %v263 = vpack.c.bf16 %v247, %v247
  %v264 = vpack.c.bf16 %v248, %v248
  %v265 = vpack.c.bf16 %v249, %v249
  %266 = vst [vmem:[%s4] sm:$0xf] %v250
  %267 = vst [vmem:[%s4 + $0x4] sm:$0xf] %v251
  %268 = vst [vmem:[%s4 + $0x8] sm:$0xf] %v252
  %269 = vst [vmem:[%s4 + $0xc] sm:$0xf] %v253
  %270 = vst [vmem:[%s4 + $0x10] sm:$0xf] %v254
  %271 = vst [vmem:[%s4 + $0x14] sm:$0xf] %v255
  %272 = vst [vmem:[%s4 + $0x18] sm:$0xf] %v256
  %273 = vst [vmem:[%s4 + $0x1c] sm:$0xf] %v257
  %274 = vst [vmem:[%s4 + $0x20] sm:$0xf] %v258
  %275 = vst [vmem:[%s4 + $0x24] sm:$0xf] %v259
  %276 = vst [vmem:[%s4 + $0x28] sm:$0xf] %v260
  %277 = vst [vmem:[%s4 + $0x2c] sm:$0xf] %v261
  %278 = vst [vmem:[%s4 + $0x30] sm:$0xf] %v262
  %279 = vst [vmem:[%s4 + $0x34] sm:$0xf] %v263
  %280 = vst [vmem:[%s4 + $0x38] sm:$0xf] %v264
  %281 = vst [vmem:[%s4 + $0x3c] sm:$0xf] %v265
  // Predicated region
  $region18: #{gin_virtualnode_forward.13} parent=0 // pred_check
    _
  $region19: #{gin_virtualnode_forward.13} parent=0 // pred_check_branch
    %283 = sbr.rel (0) target = $region21
  $region20: #{gin_virtualnode_forward.13} parent=0 // pred_region
    _
  $region21: #{gin_virtualnode_forward.13} parent=0 // pred_fallthru
    _
  // Predicated region
  $region22: #{gin_virtualnode_forward.13} parent=0 // pred_check
    _
  $region23: #{gin_virtualnode_forward.13} parent=0 // pred_check_branch
    %285 = sbr.rel (0) target = $region25
  $region24: #{gin_virtualnode_forward.13} parent=0 // pred_region
    _
  $region25: #{gin_virtualnode_forward.13} parent=0 // pred_fallthru
    _

// kernel: gin_virtualnode_forward.12
$region0: #{gin_virtualnode_forward.12}
  #allocation0 [shape = 'u32[]', space=smem, size = 0x4, offset = 0x4, fixed_abs, tag = 'smem constant byte address 0x4 - core index']
  #allocation1 [shape = 'u32[72,128]{1,0:T(1,128)}', space=vmem, size = 0x9000, scoped, tag = 'internal scratch']
  #allocation2 [shape = 'f32[1]{0:T(128)S(6)}', space=smem, size = 0x200, scoped, tag = 'scoped memory for gin_virtualnode_forward.12']
  %s0 = inlined_call_operand.vmem [shape: bf16[128,128], index: 0, kind: input, shape index: {}]
  %s1 = inlined_call_operand.vmem [shape: bf16[128,128], index: 1, kind: input, shape index: {}]
  %s2 = inlined_call_operand.vmem [shape: bf16[128,128], index: 2, kind: input, shape index: {}]
  %s3 = inlined_call_operand.<no memory space> [shape: f32[1], index: 3, kind: input, shape index: {}]
  %s4 = inlined_call_operand.vmem [shape: bf16[128,128], index: 4, kind: output, shape index: {}]
  %s5 = sld [smem:[#allocation0]]
  $region26: #{gin_virtualnode_forward.12} parent=0
    _
  %s7 = ssub.s32 1, %s5
  %s8 = scalar_select 0, %s7, %s5
  %9 = sst [smem:[#allocation2]] %s3
  // Predicated region
  $region2: #{gin_virtualnode_forward.12} parent=0 // pred_check
    _
  $region3: #{gin_virtualnode_forward.12} parent=0 // pred_check_branch
    %11 = sbr.rel (0) target = $region5
  $region4: #{gin_virtualnode_forward.12} parent=0 // pred_region
    _
  $region5: #{gin_virtualnode_forward.12} parent=0 // pred_fallthru
    _
  // Predicated region
  $region6: #{gin_virtualnode_forward.12} parent=0 // pred_check
    _
  $region7: #{gin_virtualnode_forward.12} parent=0 // pred_check_branch
    %13 = sbr.rel (0) target = $region9
  $region8: #{gin_virtualnode_forward.12} parent=0 // pred_region
    _
  $region9: #{gin_virtualnode_forward.12} parent=0 // pred_fallthru
    _
  // Predicated region
  $region10: #{gin_virtualnode_forward.12} parent=0 // pred_check
    _
  $region11: #{gin_virtualnode_forward.12} parent=0 // pred_check_branch
    %15 = sbr.rel (0) target = $region13
  $region12: #{gin_virtualnode_forward.12} parent=0 // pred_region
    _
  $region13: #{gin_virtualnode_forward.12} parent=0 // pred_fallthru
    _
  // Predicated region
  $region14: #{gin_virtualnode_forward.12} parent=0 // pred_check
    _
  $region15: #{gin_virtualnode_forward.12} parent=0 // pred_check_branch
    %17 = sbr.rel (0) target = $region17
  $region16: #{gin_virtualnode_forward.12} parent=0 // pred_region
    _
  $region17: #{gin_virtualnode_forward.12} parent=0 // pred_fallthru
    _
  %v18 = vld [vmem:[%s0] sm:$0xf]
  %v19 = vld [vmem:[%s0 + $0x4] sm:$0xf]
  %v20 = vld [vmem:[%s0 + $0x8] sm:$0xf]
  %v21 = vld [vmem:[%s0 + $0xc] sm:$0xf]
  %v22 = vld [vmem:[%s0 + $0x10] sm:$0xf]
  %v23 = vld [vmem:[%s0 + $0x14] sm:$0xf]
  %v24 = vld [vmem:[%s0 + $0x18] sm:$0xf]
  %v25 = vld [vmem:[%s0 + $0x1c] sm:$0xf]
  %v26 = vld [vmem:[%s0 + $0x20] sm:$0xf]
  %v27 = vld [vmem:[%s0 + $0x24] sm:$0xf]
  %v28 = vld [vmem:[%s0 + $0x28] sm:$0xf]
  %v29 = vld [vmem:[%s0 + $0x2c] sm:$0xf]
  %v30 = vld [vmem:[%s0 + $0x30] sm:$0xf]
  %v31 = vld [vmem:[%s0 + $0x34] sm:$0xf]
  %v32 = vld [vmem:[%s0 + $0x38] sm:$0xf]
  %v33 = vld [vmem:[%s0 + $0x3c] sm:$0xf]
  %v34 = vld [vmem:[%s1] sm:$0xf]
  %v35 = vld [vmem:[%s1 + $0x4] sm:$0xf]
  %v36 = vld [vmem:[%s1 + $0x8] sm:$0xf]
  %v37 = vld [vmem:[%s1 + $0xc] sm:$0xf]
  %v38 = vld [vmem:[%s1 + $0x10] sm:$0xf]
  %v39 = vld [vmem:[%s1 + $0x14] sm:$0xf]
  %v40 = vld [vmem:[%s1 + $0x18] sm:$0xf]
  %v41 = vld [vmem:[%s1 + $0x1c] sm:$0xf]
  %v42 = vld [vmem:[%s1 + $0x20] sm:$0xf]
  %v43 = vld [vmem:[%s1 + $0x24] sm:$0xf]
  %v44 = vld [vmem:[%s1 + $0x28] sm:$0xf]
  %v45 = vld [vmem:[%s1 + $0x2c] sm:$0xf]
  %v46 = vld [vmem:[%s1 + $0x30] sm:$0xf]
  %v47 = vld [vmem:[%s1 + $0x34] sm:$0xf]
  %v48 = vld [vmem:[%s1 + $0x38] sm:$0xf]
  %v49 = vld [vmem:[%s1 + $0x3c] sm:$0xf]
  %s50 = sld [smem:[#allocation2]]
  %v51 = vld [vmem:[%s2] sm:$0xf]
  %v52 = vld [vmem:[%s2 + $0x4] sm:$0xf]
  %v53 = vld [vmem:[%s2 + $0x8] sm:$0xf]
  %v54 = vld [vmem:[%s2 + $0xc] sm:$0xf]
  %v55 = vld [vmem:[%s2 + $0x10] sm:$0xf]
  %v56 = vld [vmem:[%s2 + $0x14] sm:$0xf]
  %v57 = vld [vmem:[%s2 + $0x18] sm:$0xf]
  %v58 = vld [vmem:[%s2 + $0x1c] sm:$0xf]
  %v59 = vld [vmem:[%s2 + $0x20] sm:$0xf]
  %v60 = vld [vmem:[%s2 + $0x24] sm:$0xf]
  %v61 = vld [vmem:[%s2 + $0x28] sm:$0xf]
  %v62 = vld [vmem:[%s2 + $0x2c] sm:$0xf]
  %v63 = vld [vmem:[%s2 + $0x30] sm:$0xf]
  %v64 = vld [vmem:[%s2 + $0x34] sm:$0xf]
  %v65 = vld [vmem:[%s2 + $0x38] sm:$0xf]
  %v66 = vld [vmem:[%s2 + $0x3c] sm:$0xf]
  %v67 = vunpack.c.l.bf16 %v51
  %v68 = vunpack.c.l.bf16 %v52
  %v69 = vunpack.c.l.bf16 %v53
  %v70 = vunpack.c.l.bf16 %v54
  %v71 = vunpack.c.l.bf16 %v55
  %v72 = vunpack.c.l.bf16 %v56
  %v73 = vunpack.c.l.bf16 %v57
  %v74 = vunpack.c.l.bf16 %v58
  %v75 = vunpack.c.l.bf16 %v59
  %v76 = vunpack.c.l.bf16 %v60
  %v77 = vunpack.c.l.bf16 %v61
  %v78 = vunpack.c.l.bf16 %v62
  %v79 = vunpack.c.l.bf16 %v63
  %v80 = vunpack.c.l.bf16 %v64
  %v81 = vunpack.c.l.bf16 %v65
  %v82 = vunpack.c.l.bf16 %v66
  %v83 = vstv %s50
  %v84 = vmul.f32 %v83, %v67
  %v85 = vmul.f32 %v83, %v68
  %v86 = vmul.f32 %v83, %v69
  %v87 = vmul.f32 %v83, %v70
  %v88 = vmul.f32 %v83, %v71
  %v89 = vmul.f32 %v83, %v72
  %v90 = vmul.f32 %v83, %v73
  %v91 = vmul.f32 %v83, %v74
  %v92 = vmul.f32 %v83, %v75
  %v93 = vmul.f32 %v83, %v76
  %v94 = vmul.f32 %v83, %v77
  %v95 = vmul.f32 %v83, %v78
  %v96 = vmul.f32 %v83, %v79
  %v97 = vmul.f32 %v83, %v80
  %v98 = vmul.f32 %v83, %v81
  %v99 = vmul.f32 %v83, %v82
  %v116 = vunpack.c.l.b16 %v18
  %v117 = vunpack.c.l.b16 %v19
  %v118 = vunpack.c.l.b16 %v20
  %v119 = vunpack.c.l.b16 %v21
  %v120 = vunpack.c.l.b16 %v22
  %v121 = vunpack.c.l.b16 %v23
  %v122 = vunpack.c.l.b16 %v24
  %v123 = vunpack.c.l.b16 %v25
  %v124 = vunpack.c.l.b16 %v26
  %v125 = vunpack.c.l.b16 %v27
  %v126 = vunpack.c.l.b16 %v28
  %v127 = vunpack.c.l.b16 %v29
  %v128 = vunpack.c.l.b16 %v30
  %v129 = vunpack.c.l.b16 %v31
  %v130 = vunpack.c.l.b16 %v32
  %v131 = vunpack.c.l.b16 %v33
  %v132 = vpack.c.b16 %v117, %v116
  %v133 = vpack.c.b16 %v119, %v118
  %v134 = vpack.c.b16 %v121, %v120
  %v135 = vpack.c.b16 %v123, %v122
  %v136 = vpack.c.b16 %v125, %v124
  %v137 = vpack.c.b16 %v127, %v126
  %v138 = vpack.c.b16 %v129, %v128
  %v139 = vpack.c.b16 %v131, %v130
  %v164 = vunpack.c.l.b16 %v34
  %v165 = vunpack.c.l.b16 %v35
  %v166 = vunpack.c.l.b16 %v36
  %v167 = vunpack.c.l.b16 %v37
  %v168 = vunpack.c.l.b16 %v38
  %v169 = vunpack.c.l.b16 %v39
  %v170 = vunpack.c.l.b16 %v40
  %v171 = vunpack.c.l.b16 %v41
  %v172 = vunpack.c.l.b16 %v42
  %v173 = vunpack.c.l.b16 %v43
  %v174 = vunpack.c.l.b16 %v44
  %v175 = vunpack.c.l.b16 %v45
  %v176 = vunpack.c.l.b16 %v46
  %v177 = vunpack.c.l.b16 %v47
  %v178 = vunpack.c.l.b16 %v48
  %v179 = vunpack.c.l.b16 %v49
  %v180 = vpack.c.b16 %v165, %v164
  %v181 = vpack.c.b16 %v167, %v166
  %v182 = vpack.c.b16 %v169, %v168
  %v183 = vpack.c.b16 %v171, %v170
  %v184 = vpack.c.b16 %v173, %v172
  %v185 = vpack.c.b16 %v175, %v174
  %v186 = vpack.c.b16 %v177, %v176
  %v187 = vpack.c.b16 %v179, %v178
  %196 = vmatpush.bf16.msra.mxu0 %v187
  %197 = vmatpush.bf16.msra.mxu0 %v186
  %198 = vmatpush.bf16.msra.mxu0 %v185
  %199 = vmatpush.bf16.msra.mxu0 %v184
  %200 = vmatpush.bf16.msra.mxu0 %v183
  %201 = vmatpush.bf16.msra.mxu0 %v182
  %202 = vmatpush.bf16.msra.mxu0 %v181
  %203 = vmatpush.bf16.msra.mxu0 %v180
  %204 = vmatmul.bf16.gmra.mxu0 %v132
  %v205 = vpop.f32.mrf.mxu0
  %v206 = vadd.f32 %v84, %v205
  %v207 = vpop.f32.mrf.mxu0
  %v208 = vadd.f32 %v85, %v207
  %209 = vmatmul.bf16.gmra.mxu0 %v133
  %v210 = vpop.f32.mrf.mxu0
  %v211 = vadd.f32 %v86, %v210
  %v212 = vpop.f32.mrf.mxu0
  %v213 = vadd.f32 %v87, %v212
  %214 = vmatmul.bf16.gmra.mxu0 %v134
  %v215 = vpop.f32.mrf.mxu0
  %v216 = vadd.f32 %v88, %v215
  %v217 = vpop.f32.mrf.mxu0
  %v218 = vadd.f32 %v89, %v217
  %219 = vmatmul.bf16.gmra.mxu0 %v135
  %v220 = vpop.f32.mrf.mxu0
  %v221 = vadd.f32 %v90, %v220
  %v222 = vpop.f32.mrf.mxu0
  %v223 = vadd.f32 %v91, %v222
  %224 = vmatmul.bf16.gmra.mxu0 %v136
  %v225 = vpop.f32.mrf.mxu0
  %v226 = vadd.f32 %v92, %v225
  %v227 = vpop.f32.mrf.mxu0
  %v228 = vadd.f32 %v93, %v227
  %229 = vmatmul.bf16.gmra.mxu0 %v137
  %v230 = vpop.f32.mrf.mxu0
  %v231 = vadd.f32 %v94, %v230
  %v232 = vpop.f32.mrf.mxu0
  %v233 = vadd.f32 %v95, %v232
  %234 = vmatmul.bf16.gmra.mxu0 %v138
  %v235 = vpop.f32.mrf.mxu0
  %v236 = vadd.f32 %v96, %v235
  %v237 = vpop.f32.mrf.mxu0
  %v238 = vadd.f32 %v97, %v237
  %239 = vmatmul.bf16.gmra.mxu0 %v139
  %v240 = vpop.f32.mrf.mxu0
  %v241 = vadd.f32 %v98, %v240
  %v242 = vpop.f32.mrf.mxu0
  %v243 = vadd.f32 %v99, %v242
  %244 = vdwg.mxu0
  %v245 = vpack.c.bf16 %v206, %v206
  %v246 = vpack.c.bf16 %v208, %v208
  %v247 = vpack.c.bf16 %v211, %v211
  %v248 = vpack.c.bf16 %v213, %v213
  %v249 = vpack.c.bf16 %v216, %v216
  %v250 = vpack.c.bf16 %v218, %v218
  %v251 = vpack.c.bf16 %v221, %v221
  %v252 = vpack.c.bf16 %v223, %v223
  %v253 = vpack.c.bf16 %v226, %v226
  %v254 = vpack.c.bf16 %v228, %v228
  %v255 = vpack.c.bf16 %v231, %v231
  %v256 = vpack.c.bf16 %v233, %v233
  %v257 = vpack.c.bf16 %v236, %v236
  %v258 = vpack.c.bf16 %v238, %v238
  %v259 = vpack.c.bf16 %v241, %v241
  %v260 = vpack.c.bf16 %v243, %v243
  %261 = vst [vmem:[%s4] sm:$0xf] %v245
  %262 = vst [vmem:[%s4 + $0x4] sm:$0xf] %v246
  %263 = vst [vmem:[%s4 + $0x8] sm:$0xf] %v247
  %264 = vst [vmem:[%s4 + $0xc] sm:$0xf] %v248
  %265 = vst [vmem:[%s4 + $0x10] sm:$0xf] %v249
  %266 = vst [vmem:[%s4 + $0x14] sm:$0xf] %v250
  %267 = vst [vmem:[%s4 + $0x18] sm:$0xf] %v251
  %268 = vst [vmem:[%s4 + $0x1c] sm:$0xf] %v252
  %269 = vst [vmem:[%s4 + $0x20] sm:$0xf] %v253
  %270 = vst [vmem:[%s4 + $0x24] sm:$0xf] %v254
  %271 = vst [vmem:[%s4 + $0x28] sm:$0xf] %v255
  %272 = vst [vmem:[%s4 + $0x2c] sm:$0xf] %v256
  %273 = vst [vmem:[%s4 + $0x30] sm:$0xf] %v257
  %274 = vst [vmem:[%s4 + $0x34] sm:$0xf] %v258
  %275 = vst [vmem:[%s4 + $0x38] sm:$0xf] %v259
  %276 = vst [vmem:[%s4 + $0x3c] sm:$0xf] %v260
  // Predicated region
  $region18: #{gin_virtualnode_forward.12} parent=0 // pred_check
    _
  $region19: #{gin_virtualnode_forward.12} parent=0 // pred_check_branch
    %278 = sbr.rel (0) target = $region21
  $region20: #{gin_virtualnode_forward.12} parent=0 // pred_region
    _
  $region21: #{gin_virtualnode_forward.12} parent=0 // pred_fallthru
    _
  // Predicated region
  $region22: #{gin_virtualnode_forward.12} parent=0 // pred_check
    _
  $region23: #{gin_virtualnode_forward.12} parent=0 // pred_check_branch
    %280 = sbr.rel (0) target = $region25
  $region24: #{gin_virtualnode_forward.12} parent=0 // pred_region
    _
  $region25: #{gin_virtualnode_forward.12} parent=0 // pred_fallthru
    _

// kernel: gin_virtualnode_forward.23
$region0: #{gin_virtualnode_forward.23}
  #allocation0 [shape = 'u32[]', space=smem, size = 0x4, offset = 0x4, fixed_abs, tag = 'smem constant byte address 0x4 - core index']
  #allocation1 [shape = 'u32[72,128]{1,0:T(1,128)}', space=vmem, size = 0x9000, scoped, tag = 'internal scratch']
  %s0 = inlined_call_operand.vmem [shape: bf16[16,128], index: 0, kind: input, shape index: {}]
  %s1 = inlined_call_operand.vmem [shape: bf16[128,128], index: 1, kind: input, shape index: {}]
  %s2 = inlined_call_operand.vmem [shape: f32[16,128], index: 2, kind: output, shape index: {}]
  %s3 = sld [smem:[#allocation0]]
  $region18: #{gin_virtualnode_forward.23} parent=0
    _
  %s5 = ssub.s32 1, %s3
  %s6 = scalar_select 0, %s5, %s3
  // Predicated region
  $region2: #{gin_virtualnode_forward.23} parent=0 // pred_check
    _
  $region3: #{gin_virtualnode_forward.23} parent=0 // pred_check_branch
    %8 = sbr.rel (0) target = $region5
  $region4: #{gin_virtualnode_forward.23} parent=0 // pred_region
    _
  $region5: #{gin_virtualnode_forward.23} parent=0 // pred_fallthru
    _
  // Predicated region
  $region6: #{gin_virtualnode_forward.23} parent=0 // pred_check
    _
  $region7: #{gin_virtualnode_forward.23} parent=0 // pred_check_branch
    %10 = sbr.rel (0) target = $region9
  $region8: #{gin_virtualnode_forward.23} parent=0 // pred_region
    _
  $region9: #{gin_virtualnode_forward.23} parent=0 // pred_fallthru
    _
  %v11 = vld [vmem:[%s0] sm:$0xf]
  %v12 = vld [vmem:[%s0 + $0x4] sm:$0xf]
  %v13 = vld [vmem:[%s1] sm:$0xf]
  %v14 = vld [vmem:[%s1 + $0x4] sm:$0xf]
  %v15 = vld [vmem:[%s1 + $0x8] sm:$0xf]
  %v16 = vld [vmem:[%s1 + $0xc] sm:$0xf]
  %v17 = vld [vmem:[%s1 + $0x10] sm:$0xf]
  %v18 = vld [vmem:[%s1 + $0x14] sm:$0xf]
  %v19 = vld [vmem:[%s1 + $0x18] sm:$0xf]
  %v20 = vld [vmem:[%s1 + $0x1c] sm:$0xf]
  %v21 = vld [vmem:[%s1 + $0x20] sm:$0xf]
  %v22 = vld [vmem:[%s1 + $0x24] sm:$0xf]
  %v23 = vld [vmem:[%s1 + $0x28] sm:$0xf]
  %v24 = vld [vmem:[%s1 + $0x2c] sm:$0xf]
  %v25 = vld [vmem:[%s1 + $0x30] sm:$0xf]
  %v26 = vld [vmem:[%s1 + $0x34] sm:$0xf]
  %v27 = vld [vmem:[%s1 + $0x38] sm:$0xf]
  %v28 = vld [vmem:[%s1 + $0x3c] sm:$0xf]
  %v31 = vunpack.c.l.b16 %v11
  %v32 = vunpack.c.l.b16 %v12
  %v33 = vpack.c.b16 %v32, %v31
  %v51 = vunpack.c.l.b16 %v13
  %v52 = vunpack.c.l.b16 %v14
  %v53 = vunpack.c.l.b16 %v15
  %v54 = vunpack.c.l.b16 %v16
  %v55 = vunpack.c.l.b16 %v17
  %v56 = vunpack.c.l.b16 %v18
  %v57 = vunpack.c.l.b16 %v19
  %v58 = vunpack.c.l.b16 %v20
  %v59 = vunpack.c.l.b16 %v21
  %v60 = vunpack.c.l.b16 %v22
  %v61 = vunpack.c.l.b16 %v23
  %v62 = vunpack.c.l.b16 %v24
  %v63 = vunpack.c.l.b16 %v25
  %v64 = vunpack.c.l.b16 %v26
  %v65 = vunpack.c.l.b16 %v27
  %v66 = vunpack.c.l.b16 %v28
  %v67 = vpack.c.b16 %v52, %v51
  %v68 = vpack.c.b16 %v54, %v53
  %v69 = vpack.c.b16 %v56, %v55
  %v70 = vpack.c.b16 %v58, %v57
  %v71 = vpack.c.b16 %v60, %v59
  %v72 = vpack.c.b16 %v62, %v61
  %v73 = vpack.c.b16 %v64, %v63
  %v74 = vpack.c.b16 %v66, %v65
  %83 = vmatpush.bf16.msra.mxu0 %v74
  %84 = vmatpush.bf16.msra.mxu0 %v73
  %85 = vmatpush.bf16.msra.mxu0 %v72
  %86 = vmatpush.bf16.msra.mxu0 %v71
  %87 = vmatpush.bf16.msra.mxu0 %v70
  %88 = vmatpush.bf16.msra.mxu0 %v69
  %89 = vmatpush.bf16.msra.mxu0 %v68
  %90 = vmatpush.bf16.msra.mxu0 %v67
  %91 = vmatmul.bf16.gmra.mxu0 %v33
  %v92 = vpop.f32.mrf.mxu0
  %v93 = vadd.f32 0.0, %v92
  %v94 = vpop.f32.mrf.mxu0
  %v95 = vadd.f32 0.0, %v94
  %96 = vdwg.mxu0
  %97 = vst [vmem:[%s2] sm:$0xff] %v93
  %98 = vst [vmem:[%s2 + $0x8] sm:$0xff] %v95
  // Predicated region
  $region10: #{gin_virtualnode_forward.23} parent=0 // pred_check
    _
  $region11: #{gin_virtualnode_forward.23} parent=0 // pred_check_branch
    %100 = sbr.rel (0) target = $region13
  $region12: #{gin_virtualnode_forward.23} parent=0 // pred_region
    _
  $region13: #{gin_virtualnode_forward.23} parent=0 // pred_fallthru
    _
  // Predicated region
  $region14: #{gin_virtualnode_forward.23} parent=0 // pred_check
    _
  $region15: #{gin_virtualnode_forward.23} parent=0 // pred_check_branch
    %102 = sbr.rel (0) target = $region17
  $region16: #{gin_virtualnode_forward.23} parent=0 // pred_region
    _
  $region17: #{gin_virtualnode_forward.23} parent=0 // pred_fallthru
    _

// kernel: gin_virtualnode_forward.22
$region0: #{gin_virtualnode_forward.22}
  #allocation0 [shape = 'u32[]', space=smem, size = 0x4, offset = 0x4, fixed_abs, tag = 'smem constant byte address 0x4 - core index']
  #allocation1 [shape = 'u32[72,128]{1,0:T(1,128)}', space=vmem, size = 0x9000, scoped, tag = 'internal scratch']
  %s0 = inlined_call_operand.vmem [shape: bf16[128,128], index: 0, kind: input, shape index: {}]
  %s1 = inlined_call_operand.vmem [shape: bf16[128,128], index: 1, kind: input, shape index: {}]
  %s2 = inlined_call_operand.vmem [shape: f32[1,128], index: 2, kind: input, shape index: {}]
  %s3 = inlined_call_operand.vmem [shape: f32[1,128], index: 3, kind: input, shape index: {}]
  %s4 = inlined_call_operand.vmem [shape: bf16[128,128], index: 4, kind: output, shape index: {}]
  %s5 = sld [smem:[#allocation0]]
  $region26: #{gin_virtualnode_forward.22} parent=0
    _
  %s7 = ssub.s32 1, %s5
  %s8 = scalar_select 0, %s7, %s5
  // Predicated region
  $region2: #{gin_virtualnode_forward.22} parent=0 // pred_check
    _
  $region3: #{gin_virtualnode_forward.22} parent=0 // pred_check_branch
    %10 = sbr.rel (0) target = $region5
  $region4: #{gin_virtualnode_forward.22} parent=0 // pred_region
    _
  $region5: #{gin_virtualnode_forward.22} parent=0 // pred_fallthru
    _
  // Predicated region
  $region6: #{gin_virtualnode_forward.22} parent=0 // pred_check
    _
  $region7: #{gin_virtualnode_forward.22} parent=0 // pred_check_branch
    %12 = sbr.rel (0) target = $region9
  $region8: #{gin_virtualnode_forward.22} parent=0 // pred_region
    _
  $region9: #{gin_virtualnode_forward.22} parent=0 // pred_fallthru
    _
  // Predicated region
  $region10: #{gin_virtualnode_forward.22} parent=0 // pred_check
    _
  $region11: #{gin_virtualnode_forward.22} parent=0 // pred_check_branch
    %14 = sbr.rel (0) target = $region13
  $region12: #{gin_virtualnode_forward.22} parent=0 // pred_region
    _
  $region13: #{gin_virtualnode_forward.22} parent=0 // pred_fallthru
    _
  // Predicated region
  $region14: #{gin_virtualnode_forward.22} parent=0 // pred_check
    _
  $region15: #{gin_virtualnode_forward.22} parent=0 // pred_check_branch
    %16 = sbr.rel (0) target = $region17
  $region16: #{gin_virtualnode_forward.22} parent=0 // pred_region
    _
  $region17: #{gin_virtualnode_forward.22} parent=0 // pred_fallthru
    _
  %v17 = vld [vmem:[%s0] sm:$0xf]
  %v18 = vld [vmem:[%s0 + $0x4] sm:$0xf]
  %v19 = vld [vmem:[%s0 + $0x8] sm:$0xf]
  %v20 = vld [vmem:[%s0 + $0xc] sm:$0xf]
  %v21 = vld [vmem:[%s0 + $0x10] sm:$0xf]
  %v22 = vld [vmem:[%s0 + $0x14] sm:$0xf]
  %v23 = vld [vmem:[%s0 + $0x18] sm:$0xf]
  %v24 = vld [vmem:[%s0 + $0x1c] sm:$0xf]
  %v25 = vld [vmem:[%s0 + $0x20] sm:$0xf]
  %v26 = vld [vmem:[%s0 + $0x24] sm:$0xf]
  %v27 = vld [vmem:[%s0 + $0x28] sm:$0xf]
  %v28 = vld [vmem:[%s0 + $0x2c] sm:$0xf]
  %v29 = vld [vmem:[%s0 + $0x30] sm:$0xf]
  %v30 = vld [vmem:[%s0 + $0x34] sm:$0xf]
  %v31 = vld [vmem:[%s0 + $0x38] sm:$0xf]
  %v32 = vld [vmem:[%s0 + $0x3c] sm:$0xf]
  %v33 = vld [vmem:[%s1] sm:$0xf]
  %v34 = vld [vmem:[%s1 + $0x4] sm:$0xf]
  %v35 = vld [vmem:[%s1 + $0x8] sm:$0xf]
  %v36 = vld [vmem:[%s1 + $0xc] sm:$0xf]
  %v37 = vld [vmem:[%s1 + $0x10] sm:$0xf]
  %v38 = vld [vmem:[%s1 + $0x14] sm:$0xf]
  %v39 = vld [vmem:[%s1 + $0x18] sm:$0xf]
  %v40 = vld [vmem:[%s1 + $0x1c] sm:$0xf]
  %v41 = vld [vmem:[%s1 + $0x20] sm:$0xf]
  %v42 = vld [vmem:[%s1 + $0x24] sm:$0xf]
  %v43 = vld [vmem:[%s1 + $0x28] sm:$0xf]
  %v44 = vld [vmem:[%s1 + $0x2c] sm:$0xf]
  %v45 = vld [vmem:[%s1 + $0x30] sm:$0xf]
  %v46 = vld [vmem:[%s1 + $0x34] sm:$0xf]
  %v47 = vld [vmem:[%s1 + $0x38] sm:$0xf]
  %v48 = vld [vmem:[%s1 + $0x3c] sm:$0xf]
  %v65 = vunpack.c.l.b16 %v17
  %v66 = vunpack.c.l.b16 %v18
  %v67 = vunpack.c.l.b16 %v19
  %v68 = vunpack.c.l.b16 %v20
  %v69 = vunpack.c.l.b16 %v21
  %v70 = vunpack.c.l.b16 %v22
  %v71 = vunpack.c.l.b16 %v23
  %v72 = vunpack.c.l.b16 %v24
  %v73 = vunpack.c.l.b16 %v25
  %v74 = vunpack.c.l.b16 %v26
  %v75 = vunpack.c.l.b16 %v27
  %v76 = vunpack.c.l.b16 %v28
  %v77 = vunpack.c.l.b16 %v29
  %v78 = vunpack.c.l.b16 %v30
  %v79 = vunpack.c.l.b16 %v31
  %v80 = vunpack.c.l.b16 %v32
  %v81 = vpack.c.b16 %v66, %v65
  %v82 = vpack.c.b16 %v68, %v67
  %v83 = vpack.c.b16 %v70, %v69
  %v84 = vpack.c.b16 %v72, %v71
  %v85 = vpack.c.b16 %v74, %v73
  %v86 = vpack.c.b16 %v76, %v75
  %v87 = vpack.c.b16 %v78, %v77
  %v88 = vpack.c.b16 %v80, %v79
  %v113 = vunpack.c.l.b16 %v33
  %v114 = vunpack.c.l.b16 %v34
  %v115 = vunpack.c.l.b16 %v35
  %v116 = vunpack.c.l.b16 %v36
  %v117 = vunpack.c.l.b16 %v37
  %v118 = vunpack.c.l.b16 %v38
  %v119 = vunpack.c.l.b16 %v39
  %v120 = vunpack.c.l.b16 %v40
  %v121 = vunpack.c.l.b16 %v41
  %v122 = vunpack.c.l.b16 %v42
  %v123 = vunpack.c.l.b16 %v43
  %v124 = vunpack.c.l.b16 %v44
  %v125 = vunpack.c.l.b16 %v45
  %v126 = vunpack.c.l.b16 %v46
  %v127 = vunpack.c.l.b16 %v47
  %v128 = vunpack.c.l.b16 %v48
  %v129 = vpack.c.b16 %v114, %v113
  %v130 = vpack.c.b16 %v116, %v115
  %v131 = vpack.c.b16 %v118, %v117
  %v132 = vpack.c.b16 %v120, %v119
  %v133 = vpack.c.b16 %v122, %v121
  %v134 = vpack.c.b16 %v124, %v123
  %v135 = vpack.c.b16 %v126, %v125
  %v136 = vpack.c.b16 %v128, %v127
  %145 = vmatpush.bf16.msra.mxu0 %v136
  %146 = vmatpush.bf16.msra.mxu0 %v135
  %147 = vmatpush.bf16.msra.mxu0 %v134
  %148 = vmatpush.bf16.msra.mxu0 %v133
  %149 = vmatpush.bf16.msra.mxu0 %v132
  %150 = vmatpush.bf16.msra.mxu0 %v131
  %151 = vmatpush.bf16.msra.mxu0 %v130
  %152 = vmatpush.bf16.msra.mxu0 %v129
  %153 = vmatmul.bf16.gmra.mxu0 %v81
  %v154 = vpop.f32.mrf.mxu0
  %v155 = vadd.f32 0.0, %v154
  %v156 = vpop.f32.mrf.mxu0
  %v157 = vadd.f32 0.0, %v156
  %158 = vmatmul.bf16.gmra.mxu0 %v82
  %v159 = vpop.f32.mrf.mxu0
  %v160 = vadd.f32 0.0, %v159
  %v161 = vpop.f32.mrf.mxu0
  %v162 = vadd.f32 0.0, %v161
  %163 = vmatmul.bf16.gmra.mxu0 %v83
  %v164 = vpop.f32.mrf.mxu0
  %v165 = vadd.f32 0.0, %v164
  %v166 = vpop.f32.mrf.mxu0
  %v167 = vadd.f32 0.0, %v166
  %168 = vmatmul.bf16.gmra.mxu0 %v84
  %v169 = vpop.f32.mrf.mxu0
  %v170 = vadd.f32 0.0, %v169
  %v171 = vpop.f32.mrf.mxu0
  %v172 = vadd.f32 0.0, %v171
  %173 = vmatmul.bf16.gmra.mxu0 %v85
  %v174 = vpop.f32.mrf.mxu0
  %v175 = vadd.f32 0.0, %v174
  %v176 = vpop.f32.mrf.mxu0
  %v177 = vadd.f32 0.0, %v176
  %178 = vmatmul.bf16.gmra.mxu0 %v86
  %v179 = vpop.f32.mrf.mxu0
  %v180 = vadd.f32 0.0, %v179
  %v181 = vpop.f32.mrf.mxu0
  %v182 = vadd.f32 0.0, %v181
  %183 = vmatmul.bf16.gmra.mxu0 %v87
  %v184 = vpop.f32.mrf.mxu0
  %v185 = vadd.f32 0.0, %v184
  %v186 = vpop.f32.mrf.mxu0
  %v187 = vadd.f32 0.0, %v186
  %188 = vmatmul.bf16.gmra.mxu0 %v88
  %v189 = vpop.f32.mrf.mxu0
  %v190 = vadd.f32 0.0, %v189
  %v191 = vpop.f32.mrf.mxu0
  %v192 = vadd.f32 0.0, %v191
  %193 = vdwg.mxu0
  %v194 = vld [vmem:[%s2] sm:$0x1]
  %v196 = vperm.slane %v194, 0
  %v198 = vmul.f32 %v155, %v196
  %v199 = vmul.f32 %v157, %v196
  %v200 = vmul.f32 %v160, %v196
  %v201 = vmul.f32 %v162, %v196
  %v202 = vmul.f32 %v165, %v196
  %v203 = vmul.f32 %v167, %v196
  %v204 = vmul.f32 %v170, %v196
  %v205 = vmul.f32 %v172, %v196
  %v206 = vmul.f32 %v175, %v196
  %v207 = vmul.f32 %v177, %v196
  %v208 = vmul.f32 %v180, %v196
  %v209 = vmul.f32 %v182, %v196
  %v210 = vmul.f32 %v185, %v196
  %v211 = vmul.f32 %v187, %v196
  %v212 = vmul.f32 %v190, %v196
  %v213 = vmul.f32 %v192, %v196
  %v214 = vld [vmem:[%s3] sm:$0x1]
  %v216 = vperm.slane %v214, 0
  %v218 = vadd.f32 %v198, %v216
  %v219 = vadd.f32 %v199, %v216
  %v220 = vadd.f32 %v200, %v216
  %v221 = vadd.f32 %v201, %v216
  %v222 = vadd.f32 %v202, %v216
  %v223 = vadd.f32 %v203, %v216
  %v224 = vadd.f32 %v204, %v216
  %v225 = vadd.f32 %v205, %v216
  %v226 = vadd.f32 %v206, %v216
  %v227 = vadd.f32 %v207, %v216
  %v228 = vadd.f32 %v208, %v216
  %v229 = vadd.f32 %v209, %v216
  %v230 = vadd.f32 %v210, %v216
  %v231 = vadd.f32 %v211, %v216
  %v232 = vadd.f32 %v212, %v216
  %v233 = vadd.f32 %v213, %v216
  %v234 = vpack.c.bf16 %v218, %v218
  %v235 = vpack.c.bf16 %v219, %v219
  %v236 = vpack.c.bf16 %v220, %v220
  %v237 = vpack.c.bf16 %v221, %v221
  %v238 = vpack.c.bf16 %v222, %v222
  %v239 = vpack.c.bf16 %v223, %v223
  %v240 = vpack.c.bf16 %v224, %v224
  %v241 = vpack.c.bf16 %v225, %v225
  %v242 = vpack.c.bf16 %v226, %v226
  %v243 = vpack.c.bf16 %v227, %v227
  %v244 = vpack.c.bf16 %v228, %v228
  %v245 = vpack.c.bf16 %v229, %v229
  %v246 = vpack.c.bf16 %v230, %v230
  %v247 = vpack.c.bf16 %v231, %v231
  %v248 = vpack.c.bf16 %v232, %v232
  %v249 = vpack.c.bf16 %v233, %v233
  %250 = vst [vmem:[%s4] sm:$0xf] %v234
  %251 = vst [vmem:[%s4 + $0x4] sm:$0xf] %v235
  %252 = vst [vmem:[%s4 + $0x8] sm:$0xf] %v236
  %253 = vst [vmem:[%s4 + $0xc] sm:$0xf] %v237
  %254 = vst [vmem:[%s4 + $0x10] sm:$0xf] %v238
  %255 = vst [vmem:[%s4 + $0x14] sm:$0xf] %v239
  %256 = vst [vmem:[%s4 + $0x18] sm:$0xf] %v240
  %257 = vst [vmem:[%s4 + $0x1c] sm:$0xf] %v241
  %258 = vst [vmem:[%s4 + $0x20] sm:$0xf] %v242
  %259 = vst [vmem:[%s4 + $0x24] sm:$0xf] %v243
  %260 = vst [vmem:[%s4 + $0x28] sm:$0xf] %v244
  %261 = vst [vmem:[%s4 + $0x2c] sm:$0xf] %v245
  %262 = vst [vmem:[%s4 + $0x30] sm:$0xf] %v246
  %263 = vst [vmem:[%s4 + $0x34] sm:$0xf] %v247
  %264 = vst [vmem:[%s4 + $0x38] sm:$0xf] %v248
  %265 = vst [vmem:[%s4 + $0x3c] sm:$0xf] %v249
  // Predicated region
  $region18: #{gin_virtualnode_forward.22} parent=0 // pred_check
    _
  $region19: #{gin_virtualnode_forward.22} parent=0 // pred_check_branch
    %267 = sbr.rel (0) target = $region21
  $region20: #{gin_virtualnode_forward.22} parent=0 // pred_region
    _
  $region21: #{gin_virtualnode_forward.22} parent=0 // pred_fallthru
    _
  // Predicated region
  $region22: #{gin_virtualnode_forward.22} parent=0 // pred_check
    _
  $region23: #{gin_virtualnode_forward.22} parent=0 // pred_check_branch
    %269 = sbr.rel (0) target = $region25
  $region24: #{gin_virtualnode_forward.22} parent=0 // pred_region
    _
  $region25: #{gin_virtualnode_forward.22} parent=0 // pred_fallthru
    _

</llo_original>
